<compile_context>
chip_gen: v7x
topology: tpu7x:2x2x1
jax: 0.10.0
libtpu: 0.0.40
codegen_flags: <defaults>
</compile_context>

<pallas_src>
import jax
import jax.numpy as jnp
from jax.experimental import pallas as pl
from jax.experimental.pallas import tpu as pltpu

K_IN = 28 * 28      # 784 logical input features
K_PAD = 896         # 784 padded up to a multiple of 128 lanes
H = 32              # hidden width
N_OUT = 10          # logical output classes
N_PAD = 128         # lane-dense padded output width
TB = 256            # batch tile (multiple of 8 sublanes; fills MXU M dim)


def mlp_kernel(x_ref, w1_ref, b1_ref, w2_ref, b2_ref, o_ref):
    # x_ref: (TB, K_PAD) bf16   w1_ref: (K_PAD, H) bf16   b1_ref: (1, H) f32
    # w2_ref: (H, N_PAD) f32    b2_ref: (1, N_PAD) f32    o_ref: (TB, N_PAD) f32
    h = jnp.dot(x_ref[...], w1_ref[...], preferred_element_type=jnp.float32)
    h = jnp.maximum(h + b1_ref[...], 0.0)          # bias + ReLU in f32 (VPU)
    o_ref[...] = (
        jnp.dot(h, w2_ref[...], preferred_element_type=jnp.float32) + b2_ref[...]
    )


def mlp_forward(x_nchw, w1, b1, w2, b2):
    """x_nchw: (B, 1, 28, 28) float32 -> logits (B, 10) float32."""
    B = x_nchw.shape[0]

    # Flatten (matches torch x.view(x.size(0), -1)), cast to bf16 for streaming,
    # zero-pad features 784 -> 896 and batch up to a multiple of TB.
    x = x_nchw.reshape(B, -1).astype(jnp.bfloat16)
    x = jnp.pad(x, ((0, 0), (0, K_PAD - K_IN)))
    Bp = pl.cdiv(B, TB) * TB
    if Bp != B:
        x = jnp.pad(x, ((0, Bp - B), (0, 0)))

    # Weights: w1 in bf16 with padded K rows (zeros contribute nothing);
    # w2/b2 zero-padded to 128 output columns for lane-dense unmasked stores.
    w1p = jnp.pad(w1.astype(jnp.bfloat16), ((0, K_PAD - K_IN), (0, 0)))   # (896, 32)
    b1p = b1.reshape(1, H).astype(jnp.float32)                            # (1, 32)
    w2p = jnp.pad(w2.astype(jnp.float32), ((0, 0), (0, N_PAD - N_OUT)))   # (32, 128)
    b2p = jnp.pad(b2.reshape(1, N_OUT).astype(jnp.float32),
                  ((0, 0), (0, N_PAD - N_OUT)))                           # (1, 128)

    grid = (Bp // TB,)

    flops = 2 * Bp * K_PAD * H + 2 * Bp * H * N_PAD
    bytes_accessed = (
        Bp * K_PAD * 2          # x (bf16)
        + K_PAD * H * 2         # w1 (bf16)
        + H * 4                 # b1
        + H * N_PAD * 4         # w2
        + N_PAD * 4             # b2
        + Bp * N_PAD * 4        # output
    )

    out = pl.pallas_call(
        mlp_kernel,
        out_shape=jax.ShapeDtypeStruct((Bp, N_PAD), jnp.float32),
        grid=grid,
        in_specs=[
            pl.BlockSpec((TB, K_PAD), lambda i: (i, 0)),   # streamed per batch tile
            pl.BlockSpec((K_PAD, H), lambda i: (0, 0)),    # resident weights
            pl.BlockSpec((1, H), lambda i: (0, 0)),
            pl.BlockSpec((H, N_PAD), lambda i: (0, 0)),
            pl.BlockSpec((1, N_PAD), lambda i: (0, 0)),
        ],
        out_specs=pl.BlockSpec((TB, N_PAD), lambda i: (i, 0)),
        compiler_params=pltpu.CompilerParams(
            dimension_semantics=("parallel",),
        ),
        cost_estimate=pl.CostEstimate(
            flops=flops, transcendentals=0, bytes_accessed=bytes_accessed
        ),
    )(x, w1p, b1p, w2p, b2p)

    # Strip batch padding and the zero-padded logit columns.
    return out[:B, :N_OUT]


def init_params(key):
    # Deterministic init mimicking nn.Linear defaults: U(-1/sqrt(fan_in), 1/sqrt(fan_in)).
    k1, k2, k3, k4 = jax.random.split(key, 4)
    bound1 = 1.0 / jnp.sqrt(K_IN)
    bound2 = 1.0 / jnp.sqrt(H)
    # Stored as (in, out) so the kernel computes x @ W.
    w1 = jax.random.uniform(k1, (K_IN, H), jnp.float32, -bound1, bound1)
    b1 = jax.random.uniform(k2, (H,), jnp.float32, -bound1, bound1)
    w2 = jax.random.uniform(k3, (H, N_OUT), jnp.float32, -bound2, bound2)
    b2 = jax.random.uniform(k4, (N_OUT,), jnp.float32, -bound2, bound2)
    return w1, b1, w2, b2


if __name__ == "__main__":
    key = jax.random.PRNGKey(0)
    kx, kp = jax.random.split(key)
    # Small batch, MNIST-like input implied by fc1 = Linear(28*28, 32).
    x = jax.random.normal(kx, (2, 1, 28, 28), jnp.float32)
    w1, b1, w2, b2 = init_params(kp)

    out = mlp_forward(x, w1, b1, w2, b2)
    out = jax.block_until_ready(out)

    # Cross-check against plain-JAX f32 reference (tolerance loosened for bf16 x/w1).
    x_flat = x.reshape(x.shape[0], -1)
    ref = jnp.maximum(x_flat @ w1 + b1, 0.0) @ w2 + b2
    assert out.shape == (2, 10)
    assert jnp.allclose(out, ref, atol=5e-2, rtol=5e-2), float(
        jnp.max(jnp.abs(out - ref))
    )

    print("KERNEL_OK")
</pallas_src>

<mosaic_0001>
module attributes {stable_mosaic.version = 11 : i64} {
  func.func @mlp_kernel(%arg0: i32, %arg1: memref<256x896xbf16, #tpu.memory_space<vmem>>, %arg2: memref<896x32xbf16, #tpu.memory_space<vmem>>, %arg3: memref<1x32xf32, #tpu.memory_space<vmem>>, %arg4: memref<32x128xf32, #tpu.memory_space<vmem>>, %arg5: memref<1x128xf32, #tpu.memory_space<vmem>>, %arg6: memref<256x128xf32, #tpu.memory_space<vmem>>) attributes {dimension_semantics = [#tpu.dimension_semantics<parallel>], iteration_bounds = array<i64: 1>, scalar_prefetch = 0 : i64, scratch_operands = 0 : i64, tpu.core_type = #tpu.core_type<tc>, window_params = [{transform_indices = @transform_0, window_bounds = array<i64: 256, 896>}, {pipeline_mode = #tpu.pipeline_mode<synchronous>, transform_indices = @transform_1, window_bounds = array<i64: 896, 32>}, {pipeline_mode = #tpu.pipeline_mode<synchronous>, transform_indices = @transform_2, window_bounds = array<i64: 1, 32>}, {pipeline_mode = #tpu.pipeline_mode<synchronous>, transform_indices = @transform_3, window_bounds = array<i64: 32, 128>}, {pipeline_mode = #tpu.pipeline_mode<synchronous>, transform_indices = @transform_4, window_bounds = array<i64: 1, 128>}, {transform_indices = @transform_5, window_bounds = array<i64: 256, 128>}]} {
    %c0 = arith.constant 0 : index
    %c0_0 = arith.constant 0 : index
    %0 = vector.load %arg1[%c0, %c0_0] : memref<256x896xbf16, #tpu.memory_space<vmem>>, vector<256x896xbf16>
    %c0_1 = arith.constant 0 : index
    %c0_2 = arith.constant 0 : index
    %1 = vector.load %arg2[%c0_1, %c0_2] : memref<896x32xbf16, #tpu.memory_space<vmem>>, vector<896x32xbf16>
    %cst = arith.constant dense<0.000000e+00> : vector<256x32xf32>
    %2 = tpu.matmul %0, %1, %cst {dimension_numbers = #tpu.dot_dimension_numbers<[1], [0], [0], [1], [0, 0, 1, 1], [], []>} : vector<256x896xbf16>, vector<896x32xbf16>, vector<256x32xf32> -> vector<256x32xf32>
    %c0_3 = arith.constant 0 : index
    %c0_4 = arith.constant 0 : index
    %3 = vector.load %arg3[%c0_3, %c0_4] : memref<1x32xf32, #tpu.memory_space<vmem>>, vector<1x32xf32>
    %4 = vector.broadcast %3 : vector<1x32xf32> to vector<256x32xf32>
    %5 = arith.addf %2, %4 : vector<256x32xf32>
    %cst_5 = arith.constant 0.000000e+00 : f32
    %6 = vector.broadcast %cst_5 : f32 to vector<256x32xf32>
    %7 = arith.maximumf %5, %6 : vector<256x32xf32>
    %c0_6 = arith.constant 0 : index
    %c0_7 = arith.constant 0 : index
    %8 = vector.load %arg4[%c0_6, %c0_7] : memref<32x128xf32, #tpu.memory_space<vmem>>, vector<32x128xf32>
    %cst_8 = arith.constant dense<0.000000e+00> : vector<256x128xf32>
    %9 = tpu.matmul %7, %8, %cst_8 {dimension_numbers = #tpu.dot_dimension_numbers<[1], [0], [0], [1], [0, 0, 1, 1], [], []>} : vector<256x32xf32>, vector<32x128xf32>, vector<256x128xf32> -> vector<256x128xf32>
    %c0_9 = arith.constant 0 : index
    %c0_10 = arith.constant 0 : index
    %10 = vector.load %arg5[%c0_9, %c0_10] : memref<1x128xf32, #tpu.memory_space<vmem>>, vector<1x128xf32>
    %11 = vector.broadcast %10 : vector<1x128xf32> to vector<256x128xf32>
    %12 = arith.addf %9, %11 : vector<256x128xf32>
    %c0_11 = arith.constant 0 : index
    %c0_12 = arith.constant 0 : index
    %13 = vector.load %arg6[%c0_11, %c0_12] : memref<256x128xf32, #tpu.memory_space<vmem>>, vector<256x128xf32>
    tpu.vector_store %arg6[%c0_11, %c0_12], %12 {strides = array<i32>} : memref<256x128xf32, #tpu.memory_space<vmem>>, vector<256x128xf32>,
    return
  }
  func.func @transform_0(%arg0: i32) -> (i32, i32) {
    %c0_i32 = arith.constant 0 : i32
    %c0_i32_0 = arith.constant 0 : i32
    return %arg0, %c0_i32 : i32, i32
  }
  func.func @transform_1(%arg0: i32) -> (i32, i32) {
    %c0_i32 = arith.constant 0 : i32
    %c0_i32_0 = arith.constant 0 : i32
    %c0_i32_1 = arith.constant 0 : i32
    return %c0_i32, %c0_i32_0 : i32, i32
  }
  func.func @transform_2(%arg0: i32) -> (i32, i32) {
    %c0_i32 = arith.constant 0 : i32
    %c0_i32_0 = arith.constant 0 : i32
    %c0_i32_1 = arith.constant 0 : i32
    return %c0_i32, %c0_i32_0 : i32, i32
  }
  func.func @transform_3(%arg0: i32) -> (i32, i32) {
    %c0_i32 = arith.constant 0 : i32
    %c0_i32_0 = arith.constant 0 : i32
    %c0_i32_1 = arith.constant 0 : i32
    return %c0_i32, %c0_i32_0 : i32, i32
  }
  func.func @transform_4(%arg0: i32) -> (i32, i32) {
    %c0_i32 = arith.constant 0 : i32
    %c0_i32_0 = arith.constant 0 : i32
    %c0_i32_1 = arith.constant 0 : i32
    return %c0_i32, %c0_i32_0 : i32, i32
  }
  func.func @transform_5(%arg0: i32) -> (i32, i32) {
    %c0_i32 = arith.constant 0 : i32
    %c0_i32_0 = arith.constant 0 : i32
    return %arg0, %c0_i32 : i32, i32
  }
}

</mosaic_0001>

<llo_original>
// kernel: tpu_custom_call.1
$region0: #{tpu_custom_call.1}
  #allocation0 [shape = 'u32[]', space=smem, size = 0x4, offset = 0x4, fixed_abs, tag = 'smem constant byte address 0x4 - core index']
  #allocation1 [shape = 'u32[144,128]{1,0:T(1,128)}', space=vmem, size = 0x12000, scoped, tag = 'internal scratch']
  %s0 = inlined_call_operand.hbm [shape: bf16[256,896], index: 0, kind: input, shape index: {}]
  %s1 = inlined_call_operand.vmem [shape: bf16[896,32], index: 1, kind: input, shape index: {}]
  %s2 = inlined_call_operand.vmem [shape: f32[1,32], index: 2, kind: input, shape index: {}]
  %s3 = inlined_call_operand.vmem [shape: f32[32,128], index: 3, kind: input, shape index: {}]
  %s4 = inlined_call_operand.vmem [shape: f32[1,128], index: 4, kind: input, shape index: {}]
  %s5 = inlined_call_operand.hbm [shape: f32[256,128], index: 5, kind: output, shape index: {}]
  %s6 = sld [smem:[#allocation0]]
  $region34: #{tpu_custom_call.1} parent=0
    _
  %s8 = ssub.s32 1, %s6
  %s9 = scalar_select 0, %s8, %s6
  $region1: #{tpu_custom_call.1} parent=0
    #allocation2 [shape = 'u8[458752]{0}', space=vmem, size = 0x70000, scoped, tag = 'input window, operand 0, single buffered']
    #allocation3 [shape = 's32[1]{0}', space=sflag, size = 0x4, scoped, tag = 'scoped memory for tpu_custom_call.1']
    #allocation4 [shape = 's32[1]{0}', space=sflag, size = 0x4, scoped, tag = 'scoped memory for tpu_custom_call.1']
    #allocation5 [shape = 'u8[131072]{0}', space=vmem, size = 0x20000, scoped, tag = 'output window, operand 0, single buffered']
    %10 = vsyncpa [#allocation3], 0
    %11 = vsyncpa [#allocation4], 0
    // Predicated region
    $region2: #{tpu_custom_call.1} parent=1 // pred_check
      _
    $region3: #{tpu_custom_call.1} parent=1 // pred_check_branch
      %13 = sbr.rel (0) target = $region5
    $region4: #{tpu_custom_call.1} parent=1 // pred_region
      %s15 = ssub.s32 14336, 14336
      %16 = vsyncadd [#allocation3], %s15
      %s17 = sshll.u32 [#allocation2], 4
      %s18 = int_to_ptr.vmem [resolvable:$true] %s17
      %23 = dma.hbm_to_vmem [thread:$0]  %s0, 14336, %s18, [#allocation3], 448, 448, 28
    $region5: #{tpu_custom_call.1} parent=1 // pred_fallthru
      _
    // Predicated region
    $region6: #{tpu_custom_call.1} parent=1 // pred_check
      _
    $region7: #{tpu_custom_call.1} parent=1 // pred_check_branch
      %25 = sbr.rel (0) target = $region9
    $region8: #{tpu_custom_call.1} parent=1 // pred_region
      _
    $region9: #{tpu_custom_call.1} parent=1 // pred_fallthru
      _
    // Predicated region
    $region10: #{tpu_custom_call.1} parent=1 // pred_check
      _
    $region11: #{tpu_custom_call.1} parent=1 // pred_check_branch
      %27 = sbr.rel (0) target = $region13
    $region12: #{tpu_custom_call.1} parent=1 // pred_region
      _
    $region13: #{tpu_custom_call.1} parent=1 // pred_fallthru
      _
    // Predicated region
    $region14: #{tpu_custom_call.1} parent=1 // pred_check
      _
    $region15: #{tpu_custom_call.1} parent=1 // pred_check_branch
      %29 = sbr.rel (0) target = $region17
    $region16: #{tpu_custom_call.1} parent=1 // pred_region
      _
    $region17: #{tpu_custom_call.1} parent=1 // pred_fallthru
      _
    // Predicated region
    $region18: #{tpu_custom_call.1} parent=1 // pred_check
      _
    $region19: #{tpu_custom_call.1} parent=1 // pred_check_branch
      %31 = sbr.rel (0) target = $region21
    $region20: #{tpu_custom_call.1} parent=1 // pred_region
      _
    $region21: #{tpu_custom_call.1} parent=1 // pred_fallthru
      _
    // Predicated region
    $region22: #{tpu_custom_call.1} parent=1 // pred_check
      _
    $region23: #{tpu_custom_call.1} parent=1 // pred_check_branch
      %33 = sbr.rel (0) target = $region25
    $region24: #{tpu_custom_call.1} parent=1 // pred_region
      %34 = dma.done [#allocation3], 14336
    $region25: #{tpu_custom_call.1} parent=1 // pred_fallthru
      _
    %v36 = vld [vmem:[#allocation2] sm:$0xff]
    %v37 = vld [vmem:[#allocation2 + $0x8] sm:$0xff]
    %v38 = vld [vmem:[#allocation2 + $0x10] sm:$0xff]
    %v39 = vld [vmem:[#allocation2 + $0x18] sm:$0xf]
    %v40 = vld [vmem:[#allocation2 + $0x1c] sm:$0xff]
    %v41 = vld [vmem:[#allocation2 + $0x24] sm:$0xff]
    %v42 = vld [vmem:[#allocation2 + $0x2c] sm:$0xff]
    %v43 = vld [vmem:[#allocation2 + $0x34] sm:$0xf]
    %v44 = vld [vmem:[#allocation2 + $0x38] sm:$0xff]
    %v45 = vld [vmem:[#allocation2 + $0x40] sm:$0xff]
    %v46 = vld [vmem:[#allocation2 + $0x48] sm:$0xff]
    %v47 = vld [vmem:[#allocation2 + $0x50] sm:$0xf]
    %v48 = vld [vmem:[#allocation2 + $0x54] sm:$0xff]
    %v49 = vld [vmem:[#allocation2 + $0x5c] sm:$0xff]
    %v50 = vld [vmem:[#allocation2 + $0x64] sm:$0xff]
    %v51 = vld [vmem:[#allocation2 + $0x6c] sm:$0xf]
    %v52 = vld [vmem:[#allocation2 + $0x70] sm:$0xff]
    %v53 = vld [vmem:[#allocation2 + $0x78] sm:$0xff]
    %v54 = vld [vmem:[#allocation2 + $0x80] sm:$0xff]
    %v55 = vld [vmem:[#allocation2 + $0x88] sm:$0xf]
    %v56 = vld [vmem:[#allocation2 + $0x8c] sm:$0xff]
    %v57 = vld [vmem:[#allocation2 + $0x94] sm:$0xff]
    %v58 = vld [vmem:[#allocation2 + $0x9c] sm:$0xff]
    %v59 = vld [vmem:[#allocation2 + $0xa4] sm:$0xf]
    %v60 = vld [vmem:[#allocation2 + $0xa8] sm:$0xff]
    %v61 = vld [vmem:[#allocation2 + $0xb0] sm:$0xff]
    %v62 = vld [vmem:[#allocation2 + $0xb8] sm:$0xff]
    %v63 = vld [vmem:[#allocation2 + $0xc0] sm:$0xf]
    %v64 = vld [vmem:[#allocation2 + $0xc4] sm:$0xff]
    %v65 = vld [vmem:[#allocation2 + $0xcc] sm:$0xff]
    %v66 = vld [vmem:[#allocation2 + $0xd4] sm:$0xff]
    %v67 = vld [vmem:[#allocation2 + $0xdc] sm:$0xf]
    %v68 = vld [vmem:[#allocation2 + $0xe0] sm:$0xff]
    %v69 = vld [vmem:[#allocation2 + $0xe8] sm:$0xff]
    %v70 = vld [vmem:[#allocation2 + $0xf0] sm:$0xff]
    %v71 = vld [vmem:[#allocation2 + $0xf8] sm:$0xf]
    %v72 = vld [vmem:[#allocation2 + $0xfc] sm:$0xff]
    %v73 = vld [vmem:[#allocation2 + $0x104] sm:$0xff]
    %v74 = vld [vmem:[#allocation2 + $0x10c] sm:$0xff]
    %v75 = vld [vmem:[#allocation2 + $0x114] sm:$0xf]
    %v76 = vld [vmem:[#allocation2 + $0x118] sm:$0xff]
    %v77 = vld [vmem:[#allocation2 + $0x120] sm:$0xff]
    %v78 = vld [vmem:[#allocation2 + $0x128] sm:$0xff]
    %v79 = vld [vmem:[#allocation2 + $0x130] sm:$0xf]
    %v80 = vld [vmem:[#allocation2 + $0x134] sm:$0xff]
    %v81 = vld [vmem:[#allocation2 + $0x13c] sm:$0xff]
    %v82 = vld [vmem:[#allocation2 + $0x144] sm:$0xff]
    %v83 = vld [vmem:[#allocation2 + $0x14c] sm:$0xf]
    %v84 = vld [vmem:[#allocation2 + $0x150] sm:$0xff]
    %v85 = vld [vmem:[#allocation2 + $0x158] sm:$0xff]
    %v86 = vld [vmem:[#allocation2 + $0x160] sm:$0xff]
    %v87 = vld [vmem:[#allocation2 + $0x168] sm:$0xf]
    %v88 = vld [vmem:[#allocation2 + $0x16c] sm:$0xff]
    %v89 = vld [vmem:[#allocation2 + $0x174] sm:$0xff]
    %v90 = vld [vmem:[#allocation2 + $0x17c] sm:$0xff]
    %v91 = vld [vmem:[#allocation2 + $0x184] sm:$0xf]
    %v92 = vld [vmem:[#allocation2 + $0x188] sm:$0xff]
    %v93 = vld [vmem:[#allocation2 + $0x190] sm:$0xff]
    %v94 = vld [vmem:[#allocation2 + $0x198] sm:$0xff]
    %v95 = vld [vmem:[#allocation2 + $0x1a0] sm:$0xf]
    %v96 = vld [vmem:[#allocation2 + $0x1a4] sm:$0xff]
    %v97 = vld [vmem:[#allocation2 + $0x1ac] sm:$0xff]
    %v98 = vld [vmem:[#allocation2 + $0x1b4] sm:$0xff]
    %v99 = vld [vmem:[#allocation2 + $0x1bc] sm:$0xf]
    %v100 = vld [vmem:[#allocation2 + $0x1c0] sm:$0xff]
    %v101 = vld [vmem:[#allocation2 + $0x1c8] sm:$0xff]
    %v102 = vld [vmem:[#allocation2 + $0x1d0] sm:$0xff]
    %v103 = vld [vmem:[#allocation2 + $0x1d8] sm:$0xf]
    %v104 = vld [vmem:[#allocation2 + $0x1dc] sm:$0xff]
    %v105 = vld [vmem:[#allocation2 + $0x1e4] sm:$0xff]
    %v106 = vld [vmem:[#allocation2 + $0x1ec] sm:$0xff]
    %v107 = vld [vmem:[#allocation2 + $0x1f4] sm:$0xf]
    %v108 = vld [vmem:[#allocation2 + $0x1f8] sm:$0xff]
    %v109 = vld [vmem:[#allocation2 + $0x200] sm:$0xff]
    %v110 = vld [vmem:[#allocation2 + $0x208] sm:$0xff]
    %v111 = vld [vmem:[#allocation2 + $0x210] sm:$0xf]
    %v112 = vld [vmem:[#allocation2 + $0x214] sm:$0xff]
    %v113 = vld [vmem:[#allocation2 + $0x21c] sm:$0xff]
    %v114 = vld [vmem:[#allocation2 + $0x224] sm:$0xff]
    %v115 = vld [vmem:[#allocation2 + $0x22c] sm:$0xf]
    %v116 = vld [vmem:[#allocation2 + $0x230] sm:$0xff]
    %v117 = vld [vmem:[#allocation2 + $0x238] sm:$0xff]
    %v118 = vld [vmem:[#allocation2 + $0x240] sm:$0xff]
    %v119 = vld [vmem:[#allocation2 + $0x248] sm:$0xf]
    %v120 = vld [vmem:[#allocation2 + $0x24c] sm:$0xff]
    %v121 = vld [vmem:[#allocation2 + $0x254] sm:$0xff]
    %v122 = vld [vmem:[#allocation2 + $0x25c] sm:$0xff]
    %v123 = vld [vmem:[#allocation2 + $0x264] sm:$0xf]
    %v124 = vld [vmem:[#allocation2 + $0x268] sm:$0xff]
    %v125 = vld [vmem:[#allocation2 + $0x270] sm:$0xff]
    %v126 = vld [vmem:[#allocation2 + $0x278] sm:$0xff]
    %v127 = vld [vmem:[#allocation2 + $0x280] sm:$0xf]
    %v128 = vld [vmem:[#allocation2 + $0x284] sm:$0xff]
    %v129 = vld [vmem:[#allocation2 + $0x28c] sm:$0xff]
    %v130 = vld [vmem:[#allocation2 + $0x294] sm:$0xff]
    %v131 = vld [vmem:[#allocation2 + $0x29c] sm:$0xf]
    %v132 = vld [vmem:[#allocation2 + $0x2a0] sm:$0xff]
    %v133 = vld [vmem:[#allocation2 + $0x2a8] sm:$0xff]
    %v134 = vld [vmem:[#allocation2 + $0x2b0] sm:$0xff]
    %v135 = vld [vmem:[#allocation2 + $0x2b8] sm:$0xf]
    %v136 = vld [vmem:[#allocation2 + $0x2bc] sm:$0xff]
    %v137 = vld [vmem:[#allocation2 + $0x2c4] sm:$0xff]
    %v138 = vld [vmem:[#allocation2 + $0x2cc] sm:$0xff]
    %v139 = vld [vmem:[#allocation2 + $0x2d4] sm:$0xf]
    %v140 = vld [vmem:[#allocation2 + $0x2d8] sm:$0xff]
    %v141 = vld [vmem:[#allocation2 + $0x2e0] sm:$0xff]
    %v142 = vld [vmem:[#allocation2 + $0x2e8] sm:$0xff]
    %v143 = vld [vmem:[#allocation2 + $0x2f0] sm:$0xf]
    %v144 = vld [vmem:[#allocation2 + $0x2f4] sm:$0xff]
    %v145 = vld [vmem:[#allocation2 + $0x2fc] sm:$0xff]
    %v146 = vld [vmem:[#allocation2 + $0x304] sm:$0xff]
    %v147 = vld [vmem:[#allocation2 + $0x30c] sm:$0xf]
    %v148 = vld [vmem:[#allocation2 + $0x310] sm:$0xff]
    %v149 = vld [vmem:[#allocation2 + $0x318] sm:$0xff]
    %v150 = vld [vmem:[#allocation2 + $0x320] sm:$0xff]
    %v151 = vld [vmem:[#allocation2 + $0x328] sm:$0xf]
    %v152 = vld [vmem:[#allocation2 + $0x32c] sm:$0xff]
    %v153 = vld [vmem:[#allocation2 + $0x334] sm:$0xff]
    %v154 = vld [vmem:[#allocation2 + $0x33c] sm:$0xff]
    %v155 = vld [vmem:[#allocation2 + $0x344] sm:$0xf]
    %v156 = vld [vmem:[#allocation2 + $0x348] sm:$0xff]
    %v157 = vld [vmem:[#allocation2 + $0x350] sm:$0xff]
    %v158 = vld [vmem:[#allocation2 + $0x358] sm:$0xff]
    %v159 = vld [vmem:[#allocation2 + $0x360] sm:$0xf]
    %v160 = vld [vmem:[#allocation2 + $0x364] sm:$0xff]
    %v161 = vld [vmem:[#allocation2 + $0x36c] sm:$0xff]
    %v162 = vld [vmem:[#allocation2 + $0x374] sm:$0xff]
    %v163 = vld [vmem:[#allocation2 + $0x37c] sm:$0xf]
    %v164 = vld [vmem:[%s1] sm:$0xf]
    %v165 = vld [vmem:[%s1 + $0x4] sm:$0xf]
    %v166 = vld [vmem:[%s1 + $0x8] sm:$0xf]
    %v167 = vld [vmem:[%s1 + $0xc] sm:$0xf]
    %v168 = vld [vmem:[%s1 + $0x10] sm:$0xf]
    %v169 = vld [vmem:[%s1 + $0x14] sm:$0xf]
    %v170 = vld [vmem:[%s1 + $0x18] sm:$0xf]
    %v171 = vld [vmem:[%s1 + $0x1c] sm:$0xf]
    %v172 = vld [vmem:[%s1 + $0x20] sm:$0xf]
    %v173 = vld [vmem:[%s1 + $0x24] sm:$0xf]
    %v174 = vld [vmem:[%s1 + $0x28] sm:$0xf]
    %v175 = vld [vmem:[%s1 + $0x2c] sm:$0xf]
    %v176 = vld [vmem:[%s1 + $0x30] sm:$0xf]
    %v177 = vld [vmem:[%s1 + $0x34] sm:$0xf]
    %v178 = vld [vmem:[%s1 + $0x38] sm:$0xf]
    %v179 = vld [vmem:[%s1 + $0x3c] sm:$0xf]
    %v180 = vld [vmem:[%s1 + $0x40] sm:$0xf]
    %v181 = vld [vmem:[%s1 + $0x44] sm:$0xf]
    %v182 = vld [vmem:[%s1 + $0x48] sm:$0xf]
    %v183 = vld [vmem:[%s1 + $0x4c] sm:$0xf]
    %v184 = vld [vmem:[%s1 + $0x50] sm:$0xf]
    %v185 = vld [vmem:[%s1 + $0x54] sm:$0xf]
    %v186 = vld [vmem:[%s1 + $0x58] sm:$0xf]
    %v187 = vld [vmem:[%s1 + $0x5c] sm:$0xf]
    %v188 = vld [vmem:[%s1 + $0x60] sm:$0xf]
    %v189 = vld [vmem:[%s1 + $0x64] sm:$0xf]
    %v190 = vld [vmem:[%s1 + $0x68] sm:$0xf]
    %v191 = vld [vmem:[%s1 + $0x6c] sm:$0xf]
    %v192 = vld [vmem:[%s1 + $0x70] sm:$0xf]
    %v193 = vld [vmem:[%s1 + $0x74] sm:$0xf]
    %v194 = vld [vmem:[%s1 + $0x78] sm:$0xf]
    %v195 = vld [vmem:[%s1 + $0x7c] sm:$0xf]
    %v196 = vld [vmem:[%s1 + $0x80] sm:$0xf]
    %v197 = vld [vmem:[%s1 + $0x84] sm:$0xf]
    %v198 = vld [vmem:[%s1 + $0x88] sm:$0xf]
    %v199 = vld [vmem:[%s1 + $0x8c] sm:$0xf]
    %v200 = vld [vmem:[%s1 + $0x90] sm:$0xf]
    %v201 = vld [vmem:[%s1 + $0x94] sm:$0xf]
    %v202 = vld [vmem:[%s1 + $0x98] sm:$0xf]
    %v203 = vld [vmem:[%s1 + $0x9c] sm:$0xf]
    %v204 = vld [vmem:[%s1 + $0xa0] sm:$0xf]
    %v205 = vld [vmem:[%s1 + $0xa4] sm:$0xf]
    %v206 = vld [vmem:[%s1 + $0xa8] sm:$0xf]
    %v207 = vld [vmem:[%s1 + $0xac] sm:$0xf]
    %v208 = vld [vmem:[%s1 + $0xb0] sm:$0xf]
    %v209 = vld [vmem:[%s1 + $0xb4] sm:$0xf]
    %v210 = vld [vmem:[%s1 + $0xb8] sm:$0xf]
    %v211 = vld [vmem:[%s1 + $0xbc] sm:$0xf]
    %v212 = vld [vmem:[%s1 + $0xc0] sm:$0xf]
    %v213 = vld [vmem:[%s1 + $0xc4] sm:$0xf]
    %v214 = vld [vmem:[%s1 + $0xc8] sm:$0xf]
    %v215 = vld [vmem:[%s1 + $0xcc] sm:$0xf]
    %v216 = vld [vmem:[%s1 + $0xd0] sm:$0xf]
    %v217 = vld [vmem:[%s1 + $0xd4] sm:$0xf]
    %v218 = vld [vmem:[%s1 + $0xd8] sm:$0xf]
    %v219 = vld [vmem:[%s1 + $0xdc] sm:$0xf]
    %v220 = vld [vmem:[%s1 + $0xe0] sm:$0xf]
    %v221 = vld [vmem:[%s1 + $0xe4] sm:$0xf]
    %v222 = vld [vmem:[%s1 + $0xe8] sm:$0xf]
    %v223 = vld [vmem:[%s1 + $0xec] sm:$0xf]
    %v224 = vld [vmem:[%s1 + $0xf0] sm:$0xf]
    %v225 = vld [vmem:[%s1 + $0xf4] sm:$0xf]
    %v226 = vld [vmem:[%s1 + $0xf8] sm:$0xf]
    %v227 = vld [vmem:[%s1 + $0xfc] sm:$0xf]
    %v228 = vld [vmem:[%s1 + $0x100] sm:$0xf]
    %v229 = vld [vmem:[%s1 + $0x104] sm:$0xf]
    %v230 = vld [vmem:[%s1 + $0x108] sm:$0xf]
    %v231 = vld [vmem:[%s1 + $0x10c] sm:$0xf]
    %v232 = vld [vmem:[%s1 + $0x110] sm:$0xf]
    %v233 = vld [vmem:[%s1 + $0x114] sm:$0xf]
    %v234 = vld [vmem:[%s1 + $0x118] sm:$0xf]
    %v235 = vld [vmem:[%s1 + $0x11c] sm:$0xf]
    %v236 = vld [vmem:[%s1 + $0x120] sm:$0xf]
    %v237 = vld [vmem:[%s1 + $0x124] sm:$0xf]
    %v238 = vld [vmem:[%s1 + $0x128] sm:$0xf]
    %v239 = vld [vmem:[%s1 + $0x12c] sm:$0xf]
    %v240 = vld [vmem:[%s1 + $0x130] sm:$0xf]
    %v241 = vld [vmem:[%s1 + $0x134] sm:$0xf]
    %v242 = vld [vmem:[%s1 + $0x138] sm:$0xf]
    %v243 = vld [vmem:[%s1 + $0x13c] sm:$0xf]
    %v244 = vld [vmem:[%s1 + $0x140] sm:$0xf]
    %v245 = vld [vmem:[%s1 + $0x144] sm:$0xf]
    %v246 = vld [vmem:[%s1 + $0x148] sm:$0xf]
    %v247 = vld [vmem:[%s1 + $0x14c] sm:$0xf]
    %v248 = vld [vmem:[%s1 + $0x150] sm:$0xf]
    %v249 = vld [vmem:[%s1 + $0x154] sm:$0xf]
    %v250 = vld [vmem:[%s1 + $0x158] sm:$0xf]
    %v251 = vld [vmem:[%s1 + $0x15c] sm:$0xf]
    %v252 = vld [vmem:[%s1 + $0x160] sm:$0xf]
    %v253 = vld [vmem:[%s1 + $0x164] sm:$0xf]
    %v254 = vld [vmem:[%s1 + $0x168] sm:$0xf]
    %v255 = vld [vmem:[%s1 + $0x16c] sm:$0xf]
    %v256 = vld [vmem:[%s1 + $0x170] sm:$0xf]
    %v257 = vld [vmem:[%s1 + $0x174] sm:$0xf]
    %v258 = vld [vmem:[%s1 + $0x178] sm:$0xf]
    %v259 = vld [vmem:[%s1 + $0x17c] sm:$0xf]
    %v260 = vld [vmem:[%s1 + $0x180] sm:$0xf]
    %v261 = vld [vmem:[%s1 + $0x184] sm:$0xf]
    %v262 = vld [vmem:[%s1 + $0x188] sm:$0xf]
    %v263 = vld [vmem:[%s1 + $0x18c] sm:$0xf]
    %v264 = vld [vmem:[%s1 + $0x190] sm:$0xf]
    %v265 = vld [vmem:[%s1 + $0x194] sm:$0xf]
    %v266 = vld [vmem:[%s1 + $0x198] sm:$0xf]
    %v267 = vld [vmem:[%s1 + $0x19c] sm:$0xf]
    %v268 = vld [vmem:[%s1 + $0x1a0] sm:$0xf]
    %v269 = vld [vmem:[%s1 + $0x1a4] sm:$0xf]
    %v270 = vld [vmem:[%s1 + $0x1a8] sm:$0xf]
    %v271 = vld [vmem:[%s1 + $0x1ac] sm:$0xf]
    %v272 = vld [vmem:[%s1 + $0x1b0] sm:$0xf]
    %v273 = vld [vmem:[%s1 + $0x1b4] sm:$0xf]
    %v274 = vld [vmem:[%s1 + $0x1b8] sm:$0xf]
    %v275 = vld [vmem:[%s1 + $0x1bc] sm:$0xf]
    %v276 = vld [vmem:[%s2] sm:$0x1]
    %v278 = vlaneseq
    %v279 = vshrl.u32 %v278, 7
    %v280 = vsub.s32 0, %v279
    %v281 = vrot.slane %v276, %v280
    %v411 = vunpack.c.l.b16 %v36
    %v412 = vunpack.c.h.b16 %v36
    %v413 = vunpack.c.l.b16 %v37
    %v414 = vunpack.c.h.b16 %v37
    %v415 = vunpack.c.l.b16 %v38
    %v416 = vunpack.c.h.b16 %v38
    %v417 = vunpack.c.l.b16 %v39
    %v418 = vunpack.c.l.b16 %v40
    %v419 = vunpack.c.h.b16 %v40
    %v420 = vunpack.c.l.b16 %v41
    %v421 = vunpack.c.h.b16 %v41
    %v422 = vunpack.c.l.b16 %v42
    %v423 = vunpack.c.h.b16 %v42
    %v424 = vunpack.c.l.b16 %v43
    %v425 = vunpack.c.l.b16 %v44
    %v426 = vunpack.c.h.b16 %v44
    %v427 = vunpack.c.l.b16 %v45
    %v428 = vunpack.c.h.b16 %v45
    %v429 = vunpack.c.l.b16 %v46
    %v430 = vunpack.c.h.b16 %v46
    %v431 = vunpack.c.l.b16 %v47
    %v432 = vunpack.c.l.b16 %v48
    %v433 = vunpack.c.h.b16 %v48
    %v434 = vunpack.c.l.b16 %v49
    %v435 = vunpack.c.h.b16 %v49
    %v436 = vunpack.c.l.b16 %v50
    %v437 = vunpack.c.h.b16 %v50
    %v438 = vunpack.c.l.b16 %v51
    %v439 = vunpack.c.l.b16 %v52
    %v440 = vunpack.c.h.b16 %v52
    %v441 = vunpack.c.l.b16 %v53
    %v442 = vunpack.c.h.b16 %v53
    %v443 = vunpack.c.l.b16 %v54
    %v444 = vunpack.c.h.b16 %v54
    %v445 = vunpack.c.l.b16 %v55
    %v446 = vunpack.c.l.b16 %v56
    %v447 = vunpack.c.h.b16 %v56
    %v448 = vunpack.c.l.b16 %v57
    %v449 = vunpack.c.h.b16 %v57
    %v450 = vunpack.c.l.b16 %v58
    %v451 = vunpack.c.h.b16 %v58
    %v452 = vunpack.c.l.b16 %v59
    %v453 = vunpack.c.l.b16 %v60
    %v454 = vunpack.c.h.b16 %v60
    %v455 = vunpack.c.l.b16 %v61
    %v456 = vunpack.c.h.b16 %v61
    %v457 = vunpack.c.l.b16 %v62
    %v458 = vunpack.c.h.b16 %v62
    %v459 = vunpack.c.l.b16 %v63
    %v460 = vunpack.c.l.b16 %v64
    %v461 = vunpack.c.h.b16 %v64
    %v462 = vunpack.c.l.b16 %v65
    %v463 = vunpack.c.h.b16 %v65
    %v464 = vunpack.c.l.b16 %v66
    %v465 = vunpack.c.h.b16 %v66
    %v466 = vunpack.c.l.b16 %v67
    %v467 = vunpack.c.l.b16 %v68
    %v468 = vunpack.c.h.b16 %v68
    %v469 = vunpack.c.l.b16 %v69
    %v470 = vunpack.c.h.b16 %v69
    %v471 = vunpack.c.l.b16 %v70
    %v472 = vunpack.c.h.b16 %v70
    %v473 = vunpack.c.l.b16 %v71
    %v474 = vunpack.c.l.b16 %v72
    %v475 = vunpack.c.h.b16 %v72
    %v476 = vunpack.c.l.b16 %v73
    %v477 = vunpack.c.h.b16 %v73
    %v478 = vunpack.c.l.b16 %v74
    %v479 = vunpack.c.h.b16 %v74
    %v480 = vunpack.c.l.b16 %v75
    %v481 = vunpack.c.l.b16 %v76
    %v482 = vunpack.c.h.b16 %v76
    %v483 = vunpack.c.l.b16 %v77
    %v484 = vunpack.c.h.b16 %v77
    %v485 = vunpack.c.l.b16 %v78
    %v486 = vunpack.c.h.b16 %v78
    %v487 = vunpack.c.l.b16 %v79
    %v488 = vunpack.c.l.b16 %v80
    %v489 = vunpack.c.h.b16 %v80
    %v490 = vunpack.c.l.b16 %v81
    %v491 = vunpack.c.h.b16 %v81
    %v492 = vunpack.c.l.b16 %v82
    %v493 = vunpack.c.h.b16 %v82
    %v494 = vunpack.c.l.b16 %v83
    %v495 = vunpack.c.l.b16 %v84
    %v496 = vunpack.c.h.b16 %v84
    %v497 = vunpack.c.l.b16 %v85
    %v498 = vunpack.c.h.b16 %v85
    %v499 = vunpack.c.l.b16 %v86
    %v500 = vunpack.c.h.b16 %v86
    %v501 = vunpack.c.l.b16 %v87
    %v502 = vunpack.c.l.b16 %v88
    %v503 = vunpack.c.h.b16 %v88
    %v504 = vunpack.c.l.b16 %v89
    %v505 = vunpack.c.h.b16 %v89
    %v506 = vunpack.c.l.b16 %v90
    %v507 = vunpack.c.h.b16 %v90
    %v508 = vunpack.c.l.b16 %v91
    %v509 = vunpack.c.l.b16 %v92
    %v510 = vunpack.c.h.b16 %v92
    %v511 = vunpack.c.l.b16 %v93
    %v512 = vunpack.c.h.b16 %v93
    %v513 = vunpack.c.l.b16 %v94
    %v514 = vunpack.c.h.b16 %v94
    %v515 = vunpack.c.l.b16 %v95
    %v516 = vunpack.c.l.b16 %v96
    %v517 = vunpack.c.h.b16 %v96
    %v518 = vunpack.c.l.b16 %v97
    %v519 = vunpack.c.h.b16 %v97
    %v520 = vunpack.c.l.b16 %v98
    %v521 = vunpack.c.h.b16 %v98
    %v522 = vunpack.c.l.b16 %v99
    %v523 = vunpack.c.l.b16 %v100
    %v524 = vunpack.c.h.b16 %v100
    %v525 = vunpack.c.l.b16 %v101
    %v526 = vunpack.c.h.b16 %v101
    %v527 = vunpack.c.l.b16 %v102
    %v528 = vunpack.c.h.b16 %v102
    %v529 = vunpack.c.l.b16 %v103
    %v530 = vunpack.c.l.b16 %v104
    %v531 = vunpack.c.h.b16 %v104
    %v532 = vunpack.c.l.b16 %v105
    %v533 = vunpack.c.h.b16 %v105
    %v534 = vunpack.c.l.b16 %v106
    %v535 = vunpack.c.h.b16 %v106
    %v536 = vunpack.c.l.b16 %v107
    %v537 = vunpack.c.l.b16 %v108
    %v538 = vunpack.c.h.b16 %v108
    %v539 = vunpack.c.l.b16 %v109
    %v540 = vunpack.c.h.b16 %v109
    %v541 = vunpack.c.l.b16 %v110
    %v542 = vunpack.c.h.b16 %v110
    %v543 = vunpack.c.l.b16 %v111
    %v544 = vunpack.c.l.b16 %v112
    %v545 = vunpack.c.h.b16 %v112
    %v546 = vunpack.c.l.b16 %v113
    %v547 = vunpack.c.h.b16 %v113
    %v548 = vunpack.c.l.b16 %v114
    %v549 = vunpack.c.h.b16 %v114
    %v550 = vunpack.c.l.b16 %v115
    %v551 = vunpack.c.l.b16 %v116
    %v552 = vunpack.c.h.b16 %v116
    %v553 = vunpack.c.l.b16 %v117
    %v554 = vunpack.c.h.b16 %v117
    %v555 = vunpack.c.l.b16 %v118
    %v556 = vunpack.c.h.b16 %v118
    %v557 = vunpack.c.l.b16 %v119
    %v558 = vunpack.c.l.b16 %v120
    %v559 = vunpack.c.h.b16 %v120
    %v560 = vunpack.c.l.b16 %v121
    %v561 = vunpack.c.h.b16 %v121
    %v562 = vunpack.c.l.b16 %v122
    %v563 = vunpack.c.h.b16 %v122
    %v564 = vunpack.c.l.b16 %v123
    %v565 = vunpack.c.l.b16 %v124
    %v566 = vunpack.c.h.b16 %v124
    %v567 = vunpack.c.l.b16 %v125
    %v568 = vunpack.c.h.b16 %v125
    %v569 = vunpack.c.l.b16 %v126
    %v570 = vunpack.c.h.b16 %v126
    %v571 = vunpack.c.l.b16 %v127
    %v572 = vunpack.c.l.b16 %v128
    %v573 = vunpack.c.h.b16 %v128
    %v574 = vunpack.c.l.b16 %v129
    %v575 = vunpack.c.h.b16 %v129
    %v576 = vunpack.c.l.b16 %v130
    %v577 = vunpack.c.h.b16 %v130
    %v578 = vunpack.c.l.b16 %v131
    %v579 = vunpack.c.l.b16 %v132
    %v580 = vunpack.c.h.b16 %v132
    %v581 = vunpack.c.l.b16 %v133
    %v582 = vunpack.c.h.b16 %v133
    %v583 = vunpack.c.l.b16 %v134
    %v584 = vunpack.c.h.b16 %v134
    %v585 = vunpack.c.l.b16 %v135
    %v586 = vunpack.c.l.b16 %v136
    %v587 = vunpack.c.h.b16 %v136
    %v588 = vunpack.c.l.b16 %v137
    %v589 = vunpack.c.h.b16 %v137
    %v590 = vunpack.c.l.b16 %v138
    %v591 = vunpack.c.h.b16 %v138
    %v592 = vunpack.c.l.b16 %v139
    %v593 = vunpack.c.l.b16 %v140
    %v594 = vunpack.c.h.b16 %v140
    %v595 = vunpack.c.l.b16 %v141
    %v596 = vunpack.c.h.b16 %v141
    %v597 = vunpack.c.l.b16 %v142
    %v598 = vunpack.c.h.b16 %v142
    %v599 = vunpack.c.l.b16 %v143
    %v600 = vunpack.c.l.b16 %v144
    %v601 = vunpack.c.h.b16 %v144
    %v602 = vunpack.c.l.b16 %v145
    %v603 = vunpack.c.h.b16 %v145
    %v604 = vunpack.c.l.b16 %v146
    %v605 = vunpack.c.h.b16 %v146
    %v606 = vunpack.c.l.b16 %v147
    %v607 = vunpack.c.l.b16 %v148
    %v608 = vunpack.c.h.b16 %v148
    %v609 = vunpack.c.l.b16 %v149
    %v610 = vunpack.c.h.b16 %v149
    %v611 = vunpack.c.l.b16 %v150
    %v612 = vunpack.c.h.b16 %v150
    %v613 = vunpack.c.l.b16 %v151
    %v614 = vunpack.c.l.b16 %v152
    %v615 = vunpack.c.h.b16 %v152
    %v616 = vunpack.c.l.b16 %v153
    %v617 = vunpack.c.h.b16 %v153
    %v618 = vunpack.c.l.b16 %v154
    %v619 = vunpack.c.h.b16 %v154
    %v620 = vunpack.c.l.b16 %v155
    %v621 = vunpack.c.l.b16 %v156
    %v622 = vunpack.c.h.b16 %v156
    %v623 = vunpack.c.l.b16 %v157
    %v624 = vunpack.c.h.b16 %v157
    %v625 = vunpack.c.l.b16 %v158
    %v626 = vunpack.c.h.b16 %v158
    %v627 = vunpack.c.l.b16 %v159
    %v628 = vunpack.c.l.b16 %v160
    %v629 = vunpack.c.h.b16 %v160
    %v630 = vunpack.c.l.b16 %v161
    %v631 = vunpack.c.h.b16 %v161
    %v632 = vunpack.c.l.b16 %v162
    %v633 = vunpack.c.h.b16 %v162
    %v634 = vunpack.c.l.b16 %v163
    %v635 = vpack.c.b16 %v418, %v411
    %v636 = vpack.c.b16 %v419, %v412
    %v637 = vpack.c.b16 %v420, %v413
    %v638 = vpack.c.b16 %v421, %v414
    %v639 = vpack.c.b16 %v422, %v415
    %v640 = vpack.c.b16 %v423, %v416
    %v641 = vpack.c.b16 %v424, %v417
    %v642 = vpack.c.b16 %v432, %v425
    %v643 = vpack.c.b16 %v433, %v426
    %v644 = vpack.c.b16 %v434, %v427
    %v645 = vpack.c.b16 %v435, %v428
    %v646 = vpack.c.b16 %v436, %v429
    %v647 = vpack.c.b16 %v437, %v430
    %v648 = vpack.c.b16 %v438, %v431
    %v649 = vpack.c.b16 %v446, %v439
    %v650 = vpack.c.b16 %v447, %v440
    %v651 = vpack.c.b16 %v448, %v441
    %v652 = vpack.c.b16 %v449, %v442
    %v653 = vpack.c.b16 %v450, %v443
    %v654 = vpack.c.b16 %v451, %v444
    %v655 = vpack.c.b16 %v452, %v445
    %v656 = vpack.c.b16 %v460, %v453
    %v657 = vpack.c.b16 %v461, %v454
    %v658 = vpack.c.b16 %v462, %v455
    %v659 = vpack.c.b16 %v463, %v456
    %v660 = vpack.c.b16 %v464, %v457
    %v661 = vpack.c.b16 %v465, %v458
    %v662 = vpack.c.b16 %v466, %v459
    %v663 = vpack.c.b16 %v474, %v467
    %v664 = vpack.c.b16 %v475, %v468
    %v665 = vpack.c.b16 %v476, %v469
    %v666 = vpack.c.b16 %v477, %v470
    %v667 = vpack.c.b16 %v478, %v471
    %v668 = vpack.c.b16 %v479, %v472
    %v669 = vpack.c.b16 %v480, %v473
    %v670 = vpack.c.b16 %v488, %v481
    %v671 = vpack.c.b16 %v489, %v482
    %v672 = vpack.c.b16 %v490, %v483
    %v673 = vpack.c.b16 %v491, %v484
    %v674 = vpack.c.b16 %v492, %v485
    %v675 = vpack.c.b16 %v493, %v486
    %v676 = vpack.c.b16 %v494, %v487
    %v677 = vpack.c.b16 %v502, %v495
    %v678 = vpack.c.b16 %v503, %v496
    %v679 = vpack.c.b16 %v504, %v497
    %v680 = vpack.c.b16 %v505, %v498
    %v681 = vpack.c.b16 %v506, %v499
    %v682 = vpack.c.b16 %v507, %v500
    %v683 = vpack.c.b16 %v508, %v501
    %v684 = vpack.c.b16 %v516, %v509
    %v685 = vpack.c.b16 %v517, %v510
    %v686 = vpack.c.b16 %v518, %v511
    %v687 = vpack.c.b16 %v519, %v512
    %v688 = vpack.c.b16 %v520, %v513
    %v689 = vpack.c.b16 %v521, %v514
    %v690 = vpack.c.b16 %v522, %v515
    %v691 = vpack.c.b16 %v530, %v523
    %v692 = vpack.c.b16 %v531, %v524
    %v693 = vpack.c.b16 %v532, %v525
    %v694 = vpack.c.b16 %v533, %v526
    %v695 = vpack.c.b16 %v534, %v527
    %v696 = vpack.c.b16 %v535, %v528
    %v697 = vpack.c.b16 %v536, %v529
    %v698 = vpack.c.b16 %v544, %v537
    %v699 = vpack.c.b16 %v545, %v538
    %v700 = vpack.c.b16 %v546, %v539
    %v701 = vpack.c.b16 %v547, %v540
    %v702 = vpack.c.b16 %v548, %v541
    %v703 = vpack.c.b16 %v549, %v542
    %v704 = vpack.c.b16 %v550, %v543
    %v705 = vpack.c.b16 %v558, %v551
    %v706 = vpack.c.b16 %v559, %v552
    %v707 = vpack.c.b16 %v560, %v553
    %v708 = vpack.c.b16 %v561, %v554
    %v709 = vpack.c.b16 %v562, %v555
    %v710 = vpack.c.b16 %v563, %v556
    %v711 = vpack.c.b16 %v564, %v557
    %v712 = vpack.c.b16 %v572, %v565
    %v713 = vpack.c.b16 %v573, %v566
    %v714 = vpack.c.b16 %v574, %v567
    %v715 = vpack.c.b16 %v575, %v568
    %v716 = vpack.c.b16 %v576, %v569
    %v717 = vpack.c.b16 %v577, %v570
    %v718 = vpack.c.b16 %v578, %v571
    %v719 = vpack.c.b16 %v586, %v579
    %v720 = vpack.c.b16 %v587, %v580
    %v721 = vpack.c.b16 %v588, %v581
    %v722 = vpack.c.b16 %v589, %v582
    %v723 = vpack.c.b16 %v590, %v583
    %v724 = vpack.c.b16 %v591, %v584
    %v725 = vpack.c.b16 %v592, %v585
    %v726 = vpack.c.b16 %v600, %v593
    %v727 = vpack.c.b16 %v601, %v594
    %v728 = vpack.c.b16 %v602, %v595
    %v729 = vpack.c.b16 %v603, %v596
    %v730 = vpack.c.b16 %v604, %v597
    %v731 = vpack.c.b16 %v605, %v598
    %v732 = vpack.c.b16 %v606, %v599
    %v733 = vpack.c.b16 %v614, %v607
    %v734 = vpack.c.b16 %v615, %v608
    %v735 = vpack.c.b16 %v616, %v609
    %v736 = vpack.c.b16 %v617, %v610
    %v737 = vpack.c.b16 %v618, %v611
    %v738 = vpack.c.b16 %v619, %v612
    %v739 = vpack.c.b16 %v620, %v613
    %v740 = vpack.c.b16 %v628, %v621
    %v741 = vpack.c.b16 %v629, %v622
    %v742 = vpack.c.b16 %v630, %v623
    %v743 = vpack.c.b16 %v631, %v624
    %v744 = vpack.c.b16 %v632, %v625
    %v745 = vpack.c.b16 %v633, %v626
    %v746 = vpack.c.b16 %v634, %v627
    %v971 = vunpack.c.l.b16 %v164
    %v972 = vunpack.c.l.b16 %v165
    %v973 = vunpack.c.l.b16 %v166
    %v974 = vunpack.c.l.b16 %v167
    %v975 = vunpack.c.l.b16 %v168
    %v976 = vunpack.c.l.b16 %v169
    %v977 = vunpack.c.l.b16 %v170
    %v978 = vunpack.c.l.b16 %v171
    %v979 = vunpack.c.l.b16 %v172
    %v980 = vunpack.c.l.b16 %v173
    %v981 = vunpack.c.l.b16 %v174
    %v982 = vunpack.c.l.b16 %v175
    %v983 = vunpack.c.l.b16 %v176
    %v984 = vunpack.c.l.b16 %v177
    %v985 = vunpack.c.l.b16 %v178
    %v986 = vunpack.c.l.b16 %v179
    %v987 = vunpack.c.l.b16 %v180
    %v988 = vunpack.c.l.b16 %v181
    %v989 = vunpack.c.l.b16 %v182
    %v990 = vunpack.c.l.b16 %v183
    %v991 = vunpack.c.l.b16 %v184
    %v992 = vunpack.c.l.b16 %v185
    %v993 = vunpack.c.l.b16 %v186
    %v994 = vunpack.c.l.b16 %v187
    %v995 = vunpack.c.l.b16 %v188
    %v996 = vunpack.c.l.b16 %v189
    %v997 = vunpack.c.l.b16 %v190
    %v998 = vunpack.c.l.b16 %v191
    %v999 = vunpack.c.l.b16 %v192
    %v1000 = vunpack.c.l.b16 %v193
    %v1001 = vunpack.c.l.b16 %v194
    %v1002 = vunpack.c.l.b16 %v195
    %v1003 = vunpack.c.l.b16 %v196
    %v1004 = vunpack.c.l.b16 %v197
    %v1005 = vunpack.c.l.b16 %v198
    %v1006 = vunpack.c.l.b16 %v199
    %v1007 = vunpack.c.l.b16 %v200
    %v1008 = vunpack.c.l.b16 %v201
    %v1009 = vunpack.c.l.b16 %v202
    %v1010 = vunpack.c.l.b16 %v203
    %v1011 = vunpack.c.l.b16 %v204
    %v1012 = vunpack.c.l.b16 %v205
    %v1013 = vunpack.c.l.b16 %v206
    %v1014 = vunpack.c.l.b16 %v207
    %v1015 = vunpack.c.l.b16 %v208
    %v1016 = vunpack.c.l.b16 %v209
    %v1017 = vunpack.c.l.b16 %v210
    %v1018 = vunpack.c.l.b16 %v211
    %v1019 = vunpack.c.l.b16 %v212
    %v1020 = vunpack.c.l.b16 %v213
    %v1021 = vunpack.c.l.b16 %v214
    %v1022 = vunpack.c.l.b16 %v215
    %v1023 = vunpack.c.l.b16 %v216
    %v1024 = vunpack.c.l.b16 %v217
    %v1025 = vunpack.c.l.b16 %v218
    %v1026 = vunpack.c.l.b16 %v219
    %v1027 = vunpack.c.l.b16 %v220
    %v1028 = vunpack.c.l.b16 %v221
    %v1029 = vunpack.c.l.b16 %v222
    %v1030 = vunpack.c.l.b16 %v223
    %v1031 = vunpack.c.l.b16 %v224
    %v1032 = vunpack.c.l.b16 %v225
    %v1033 = vunpack.c.l.b16 %v226
    %v1034 = vunpack.c.l.b16 %v227
    %v1035 = vunpack.c.l.b16 %v228
    %v1036 = vunpack.c.l.b16 %v229
    %v1037 = vunpack.c.l.b16 %v230
    %v1038 = vunpack.c.l.b16 %v231
    %v1039 = vunpack.c.l.b16 %v232
    %v1040 = vunpack.c.l.b16 %v233
    %v1041 = vunpack.c.l.b16 %v234
    %v1042 = vunpack.c.l.b16 %v235
    %v1043 = vunpack.c.l.b16 %v236
    %v1044 = vunpack.c.l.b16 %v237
    %v1045 = vunpack.c.l.b16 %v238
    %v1046 = vunpack.c.l.b16 %v239
    %v1047 = vunpack.c.l.b16 %v240
    %v1048 = vunpack.c.l.b16 %v241
    %v1049 = vunpack.c.l.b16 %v242
    %v1050 = vunpack.c.l.b16 %v243
    %v1051 = vunpack.c.l.b16 %v244
    %v1052 = vunpack.c.l.b16 %v245
    %v1053 = vunpack.c.l.b16 %v246
    %v1054 = vunpack.c.l.b16 %v247
    %v1055 = vunpack.c.l.b16 %v248
    %v1056 = vunpack.c.l.b16 %v249
    %v1057 = vunpack.c.l.b16 %v250
    %v1058 = vunpack.c.l.b16 %v251
    %v1059 = vunpack.c.l.b16 %v252
    %v1060 = vunpack.c.l.b16 %v253
    %v1061 = vunpack.c.l.b16 %v254
    %v1062 = vunpack.c.l.b16 %v255
    %v1063 = vunpack.c.l.b16 %v256
    %v1064 = vunpack.c.l.b16 %v257
    %v1065 = vunpack.c.l.b16 %v258
    %v1066 = vunpack.c.l.b16 %v259
    %v1067 = vunpack.c.l.b16 %v260
    %v1068 = vunpack.c.l.b16 %v261
    %v1069 = vunpack.c.l.b16 %v262
    %v1070 = vunpack.c.l.b16 %v263
    %v1071 = vunpack.c.l.b16 %v264
    %v1072 = vunpack.c.l.b16 %v265
    %v1073 = vunpack.c.l.b16 %v266
    %v1074 = vunpack.c.l.b16 %v267
    %v1075 = vunpack.c.l.b16 %v268
    %v1076 = vunpack.c.l.b16 %v269
    %v1077 = vunpack.c.l.b16 %v270
    %v1078 = vunpack.c.l.b16 %v271
    %v1079 = vunpack.c.l.b16 %v272
    %v1080 = vunpack.c.l.b16 %v273
    %v1081 = vunpack.c.l.b16 %v274
    %v1082 = vunpack.c.l.b16 %v275
    %v1083 = vpack.c.b16 %v972, %v971
    %v1084 = vpack.c.b16 %v974, %v973
    %v1085 = vpack.c.b16 %v976, %v975
    %v1086 = vpack.c.b16 %v978, %v977
    %v1087 = vpack.c.b16 %v980, %v979
    %v1088 = vpack.c.b16 %v982, %v981
    %v1089 = vpack.c.b16 %v984, %v983
    %v1090 = vpack.c.b16 %v986, %v985
    %v1091 = vpack.c.b16 %v988, %v987
    %v1092 = vpack.c.b16 %v990, %v989
    %v1093 = vpack.c.b16 %v992, %v991
    %v1094 = vpack.c.b16 %v994, %v993
    %v1095 = vpack.c.b16 %v996, %v995
    %v1096 = vpack.c.b16 %v998, %v997
    %v1097 = vpack.c.b16 %v1000, %v999
    %v1098 = vpack.c.b16 %v1002, %v1001
    %v1099 = vpack.c.b16 %v1004, %v1003
    %v1100 = vpack.c.b16 %v1006, %v1005
    %v1101 = vpack.c.b16 %v1008, %v1007
    %v1102 = vpack.c.b16 %v1010, %v1009
    %v1103 = vpack.c.b16 %v1012, %v1011
    %v1104 = vpack.c.b16 %v1014, %v1013
    %v1105 = vpack.c.b16 %v1016, %v1015
    %v1106 = vpack.c.b16 %v1018, %v1017
    %v1107 = vpack.c.b16 %v1020, %v1019
    %v1108 = vpack.c.b16 %v1022, %v1021
    %v1109 = vpack.c.b16 %v1024, %v1023
    %v1110 = vpack.c.b16 %v1026, %v1025
    %v1111 = vpack.c.b16 %v1028, %v1027
    %v1112 = vpack.c.b16 %v1030, %v1029
    %v1113 = vpack.c.b16 %v1032, %v1031
    %v1114 = vpack.c.b16 %v1034, %v1033
    %v1115 = vpack.c.b16 %v1036, %v1035
    %v1116 = vpack.c.b16 %v1038, %v1037
    %v1117 = vpack.c.b16 %v1040, %v1039
    %v1118 = vpack.c.b16 %v1042, %v1041
    %v1119 = vpack.c.b16 %v1044, %v1043
    %v1120 = vpack.c.b16 %v1046, %v1045
    %v1121 = vpack.c.b16 %v1048, %v1047
    %v1122 = vpack.c.b16 %v1050, %v1049
    %v1123 = vpack.c.b16 %v1052, %v1051
    %v1124 = vpack.c.b16 %v1054, %v1053
    %v1125 = vpack.c.b16 %v1056, %v1055
    %v1126 = vpack.c.b16 %v1058, %v1057
    %v1127 = vpack.c.b16 %v1060, %v1059
    %v1128 = vpack.c.b16 %v1062, %v1061
    %v1129 = vpack.c.b16 %v1064, %v1063
    %v1130 = vpack.c.b16 %v1066, %v1065
    %v1131 = vpack.c.b16 %v1068, %v1067
    %v1132 = vpack.c.b16 %v1070, %v1069
    %v1133 = vpack.c.b16 %v1072, %v1071
    %v1134 = vpack.c.b16 %v1074, %v1073
    %v1135 = vpack.c.b16 %v1076, %v1075
    %v1136 = vpack.c.b16 %v1078, %v1077
    %v1137 = vpack.c.b16 %v1080, %v1079
    %v1138 = vpack.c.b16 %v1082, %v1081
    %1195 = vmatprep.subr.bf16.mxu0 0
    %1196 = vmatpush1.bf16.msra.mxu0 %v1083
    %1197 = vmatprep.subr.bf16.mxu0 0
    %1198 = vmatpush1.bf16.msra.mxu0 %v1084
    %1199 = vmatprep.subr.bf16.mxu0 0
    %1200 = vmatpush1.bf16.msra.mxu0 %v1085
    %1201 = vmatprep.subr.bf16.mxu0 0
    %1202 = vmatpush1.bf16.msra.mxu0 %v1086
    %1203 = vmatprep.subr.bf16.mxu0 0
    %1204 = vmatpush1.bf16.msra.mxu0 %v1087
    %1205 = vmatprep.subr.bf16.mxu0 0
    %1206 = vmatpush1.bf16.msra.mxu0 %v1088
    %1207 = vmatprep.subr.bf16.mxu0 0
    %1208 = vmatpush1.bf16.msra.mxu0 %v1089
    %1209 = vmatprep.subr.bf16.mxu0 0
    %1210 = vmatpush1.bf16.msra.mxu0 %v1090
    %1211 = vmatprep.subr.bf16.mxu0 0
    %1212 = vmatpush1.bf16.msra.mxu0 %v1091
    %1213 = vmatprep.subr.bf16.mxu0 0
    %1214 = vmatpush1.bf16.msra.mxu0 %v1092
    %1215 = vmatprep.subr.bf16.mxu0 0
    %1216 = vmatpush1.bf16.msra.mxu0 %v1093
    %1217 = vmatprep.subr.bf16.mxu0 0
    %1218 = vmatpush1.bf16.msra.mxu0 %v1094
    %1219 = vmatprep.subr.bf16.mxu0 0
    %1220 = vmatpush1.bf16.msra.mxu0 %v1095
    %1221 = vmatprep.subr.bf16.mxu0 0
    %1222 = vmatpush1.bf16.msra.mxu0 %v1096
    %1223 = vmatprep.subr.bf16.mxu0 0
    %1224 = vmatpush1.bf16.msra.mxu0 %v1097
    %1225 = vmatprep.subr.bf16.mxu0 0
    %1226 = vmatpush1.bf16.msra.mxu0 %v1098
    %1227 = vmatprep.mubr.bf16.mxu0 %v636
    %1228 = vmatmul.mubr.bf16.gmra.mrb[0].mxu0 %v635
    %v1229 = vpop.f32.mrb[0].mxu0
    %v1230 = vadd.f32 %v281, %v1229
    %v1231 = vpop.f32.mrb[0].mxu0
    %v1232 = vpop.f32.mrb[0].mxu0
    %v1233 = vadd.f32 %v281, %v1232
    %v1234 = vpop.f32.mrb[0].mxu0
    %1235 = vmatprep.mubr.bf16.mxu0 %v643
    %1236 = vmatmul.mubr.bf16.gmra.mrb[0].mxu0 %v642
    %v1237 = vpop.f32.mrb[0].mxu0
    %v1238 = vadd.f32 %v281, %v1237
    %v1239 = vpop.f32.mrb[0].mxu0
    %v1240 = vpop.f32.mrb[0].mxu0
    %v1241 = vadd.f32 %v281, %v1240
    %v1242 = vpop.f32.mrb[0].mxu0
    %1243 = vmatprep.mubr.bf16.mxu0 %v650
    %1244 = vmatmul.mubr.bf16.gmra.mrb[0].mxu0 %v649
    %v1245 = vpop.f32.mrb[0].mxu0
    %v1246 = vadd.f32 %v281, %v1245
    %v1247 = vpop.f32.mrb[0].mxu0
    %v1248 = vpop.f32.mrb[0].mxu0
    %v1249 = vadd.f32 %v281, %v1248
    %v1250 = vpop.f32.mrb[0].mxu0
    %1251 = vmatprep.mubr.bf16.mxu0 %v657
    %1252 = vmatmul.mubr.bf16.gmra.mrb[0].mxu0 %v656
    %v1253 = vpop.f32.mrb[0].mxu0
    %v1254 = vadd.f32 %v281, %v1253
    %v1255 = vpop.f32.mrb[0].mxu0
    %v1256 = vpop.f32.mrb[0].mxu0
    %v1257 = vadd.f32 %v281, %v1256
    %v1258 = vpop.f32.mrb[0].mxu0
    %1259 = vmatprep.mubr.bf16.mxu0 %v664
    %1260 = vmatmul.mubr.bf16.gmra.mrb[0].mxu0 %v663
    %v1261 = vpop.f32.mrb[0].mxu0
    %v1262 = vadd.f32 %v281, %v1261
    %v1263 = vpop.f32.mrb[0].mxu0
    %v1264 = vpop.f32.mrb[0].mxu0
    %v1265 = vadd.f32 %v281, %v1264
    %v1266 = vpop.f32.mrb[0].mxu0
    %1267 = vmatprep.mubr.bf16.mxu0 %v671
    %1268 = vmatmul.mubr.bf16.gmra.mrb[0].mxu0 %v670
    %v1269 = vpop.f32.mrb[0].mxu0
    %v1270 = vadd.f32 %v281, %v1269
    %v1271 = vpop.f32.mrb[0].mxu0
    %v1272 = vpop.f32.mrb[0].mxu0
    %v1273 = vadd.f32 %v281, %v1272
    %v1274 = vpop.f32.mrb[0].mxu0
    %1275 = vmatprep.mubr.bf16.mxu0 %v678
    %1276 = vmatmul.mubr.bf16.gmra.mrb[0].mxu0 %v677
    %v1277 = vpop.f32.mrb[0].mxu0
    %v1278 = vadd.f32 %v281, %v1277
    %v1279 = vpop.f32.mrb[0].mxu0
    %v1280 = vpop.f32.mrb[0].mxu0
    %v1281 = vadd.f32 %v281, %v1280
    %v1282 = vpop.f32.mrb[0].mxu0
    %1283 = vmatprep.mubr.bf16.mxu0 %v685
    %1284 = vmatmul.mubr.bf16.gmra.mrb[0].mxu0 %v684
    %v1285 = vpop.f32.mrb[0].mxu0
    %v1286 = vadd.f32 %v281, %v1285
    %v1287 = vpop.f32.mrb[0].mxu0
    %v1288 = vpop.f32.mrb[0].mxu0
    %v1289 = vadd.f32 %v281, %v1288
    %v1290 = vpop.f32.mrb[0].mxu0
    %1291 = vmatprep.mubr.bf16.mxu0 %v692
    %1292 = vmatmul.mubr.bf16.gmra.mrb[0].mxu0 %v691
    %v1293 = vpop.f32.mrb[0].mxu0
    %v1294 = vadd.f32 %v281, %v1293
    %v1295 = vpop.f32.mrb[0].mxu0
    %v1296 = vpop.f32.mrb[0].mxu0
    %v1297 = vadd.f32 %v281, %v1296
    %v1298 = vpop.f32.mrb[0].mxu0
    %1299 = vmatprep.mubr.bf16.mxu0 %v699
    %1300 = vmatmul.mubr.bf16.gmra.mrb[0].mxu0 %v698
    %v1301 = vpop.f32.mrb[0].mxu0
    %v1302 = vadd.f32 %v281, %v1301
    %v1303 = vpop.f32.mrb[0].mxu0
    %v1304 = vpop.f32.mrb[0].mxu0
    %v1305 = vadd.f32 %v281, %v1304
    %v1306 = vpop.f32.mrb[0].mxu0
    %1307 = vmatprep.mubr.bf16.mxu0 %v706
    %1308 = vmatmul.mubr.bf16.gmra.mrb[0].mxu0 %v705
    %v1309 = vpop.f32.mrb[0].mxu0
    %v1310 = vadd.f32 %v281, %v1309
    %v1311 = vpop.f32.mrb[0].mxu0
    %v1312 = vpop.f32.mrb[0].mxu0
    %v1313 = vadd.f32 %v281, %v1312
    %v1314 = vpop.f32.mrb[0].mxu0
    %1315 = vmatprep.mubr.bf16.mxu0 %v713
    %1316 = vmatmul.mubr.bf16.gmra.mrb[0].mxu0 %v712
    %v1317 = vpop.f32.mrb[0].mxu0
    %v1318 = vadd.f32 %v281, %v1317
    %v1319 = vpop.f32.mrb[0].mxu0
    %v1320 = vpop.f32.mrb[0].mxu0
    %v1321 = vadd.f32 %v281, %v1320
    %v1322 = vpop.f32.mrb[0].mxu0
    %1323 = vmatprep.mubr.bf16.mxu0 %v720
    %1324 = vmatmul.mubr.bf16.gmra.mrb[0].mxu0 %v719
    %v1325 = vpop.f32.mrb[0].mxu0
    %v1326 = vadd.f32 %v281, %v1325
    %v1327 = vpop.f32.mrb[0].mxu0
    %v1328 = vpop.f32.mrb[0].mxu0
    %v1329 = vadd.f32 %v281, %v1328
    %v1330 = vpop.f32.mrb[0].mxu0
    %1331 = vmatprep.mubr.bf16.mxu0 %v727
    %1332 = vmatmul.mubr.bf16.gmra.mrb[0].mxu0 %v726
    %v1333 = vpop.f32.mrb[0].mxu0
    %v1334 = vadd.f32 %v281, %v1333
    %v1335 = vpop.f32.mrb[0].mxu0
    %v1336 = vpop.f32.mrb[0].mxu0
    %v1337 = vadd.f32 %v281, %v1336
    %v1338 = vpop.f32.mrb[0].mxu0
    %1339 = vmatprep.mubr.bf16.mxu0 %v734
    %1340 = vmatmul.mubr.bf16.gmra.mrb[0].mxu0 %v733
    %v1341 = vpop.f32.mrb[0].mxu0
    %v1342 = vadd.f32 %v281, %v1341
    %v1343 = vpop.f32.mrb[0].mxu0
    %v1344 = vpop.f32.mrb[0].mxu0
    %v1345 = vadd.f32 %v281, %v1344
    %v1346 = vpop.f32.mrb[0].mxu0
    %1347 = vmatprep.mubr.bf16.mxu0 %v741
    %1348 = vmatmul.mubr.bf16.gmra.mrb[0].mxu0 %v740
    %v1349 = vpop.f32.mrb[0].mxu0
    %v1350 = vadd.f32 %v281, %v1349
    %v1351 = vpop.f32.mrb[0].mxu0
    %v1352 = vpop.f32.mrb[0].mxu0
    %v1353 = vadd.f32 %v281, %v1352
    %v1354 = vpop.f32.mrb[0].mxu0
    %1355 = vdwg.mxu0
    %1356 = vmatprep.subr.bf16.mxu0 0
    %1357 = vmatpush1.bf16.msra.mxu0 %v1099
    %1358 = vmatprep.subr.bf16.mxu0 0
    %1359 = vmatpush1.bf16.msra.mxu0 %v1100
    %1360 = vmatprep.subr.bf16.mxu0 0
    %1361 = vmatpush1.bf16.msra.mxu0 %v1101
    %1362 = vmatprep.subr.bf16.mxu0 0
    %1363 = vmatpush1.bf16.msra.mxu0 %v1102
    %1364 = vmatprep.subr.bf16.mxu0 0
    %1365 = vmatpush1.bf16.msra.mxu0 %v1103
    %1366 = vmatprep.subr.bf16.mxu0 0
    %1367 = vmatpush1.bf16.msra.mxu0 %v1104
    %1368 = vmatprep.subr.bf16.mxu0 0
    %1369 = vmatpush1.bf16.msra.mxu0 %v1105
    %1370 = vmatprep.subr.bf16.mxu0 0
    %1371 = vmatpush1.bf16.msra.mxu0 %v1106
    %1372 = vmatprep.subr.bf16.mxu0 0
    %1373 = vmatpush1.bf16.msra.mxu0 %v1107
    %1374 = vmatprep.subr.bf16.mxu0 0
    %1375 = vmatpush1.bf16.msra.mxu0 %v1108
    %1376 = vmatprep.subr.bf16.mxu0 0
    %1377 = vmatpush1.bf16.msra.mxu0 %v1109
    %1378 = vmatprep.subr.bf16.mxu0 0
    %1379 = vmatpush1.bf16.msra.mxu0 %v1110
    %1380 = vmatprep.subr.bf16.mxu0 0
    %1381 = vmatpush1.bf16.msra.mxu0 %v1111
    %1382 = vmatprep.subr.bf16.mxu0 0
    %1383 = vmatpush1.bf16.msra.mxu0 %v1112
    %1384 = vmatprep.subr.bf16.mxu0 0
    %1385 = vmatpush1.bf16.msra.mxu0 %v1113
    %1386 = vmatprep.subr.bf16.mxu0 0
    %1387 = vmatpush1.bf16.msra.mxu0 %v1114
    %1388 = vmatprep.mubr.bf16.mxu0 %v638
    %1389 = vmatmul.mubr.bf16.gmra.mrb[0].mxu0 %v637
    %v1390 = vpop.f32.mrb[0].mxu0
    %v1391 = vadd.f32 %v1230, %v1390
    %v1392 = vpop.f32.mrb[0].mxu0
    %v1393 = vpop.f32.mrb[0].mxu0
    %v1394 = vadd.f32 %v1233, %v1393
    %v1395 = vpop.f32.mrb[0].mxu0
    %1396 = vmatprep.mubr.bf16.mxu0 %v645
    %1397 = vmatmul.mubr.bf16.gmra.mrb[0].mxu0 %v644
    %v1398 = vpop.f32.mrb[0].mxu0
    %v1399 = vadd.f32 %v1238, %v1398
    %v1400 = vpop.f32.mrb[0].mxu0
    %v1401 = vpop.f32.mrb[0].mxu0
    %v1402 = vadd.f32 %v1241, %v1401
    %v1403 = vpop.f32.mrb[0].mxu0
    %1404 = vmatprep.mubr.bf16.mxu0 %v652
    %1405 = vmatmul.mubr.bf16.gmra.mrb[0].mxu0 %v651
    %v1406 = vpop.f32.mrb[0].mxu0
    %v1407 = vadd.f32 %v1246, %v1406
    %v1408 = vpop.f32.mrb[0].mxu0
    %v1409 = vpop.f32.mrb[0].mxu0
    %v1410 = vadd.f32 %v1249, %v1409
    %v1411 = vpop.f32.mrb[0].mxu0
    %1412 = vmatprep.mubr.bf16.mxu0 %v659
    %1413 = vmatmul.mubr.bf16.gmra.mrb[0].mxu0 %v658
    %v1414 = vpop.f32.mrb[0].mxu0
    %v1415 = vadd.f32 %v1254, %v1414
    %v1416 = vpop.f32.mrb[0].mxu0
    %v1417 = vpop.f32.mrb[0].mxu0
    %v1418 = vadd.f32 %v1257, %v1417
    %v1419 = vpop.f32.mrb[0].mxu0
    %1420 = vmatprep.mubr.bf16.mxu0 %v666
    %1421 = vmatmul.mubr.bf16.gmra.mrb[0].mxu0 %v665
    %v1422 = vpop.f32.mrb[0].mxu0
    %v1423 = vadd.f32 %v1262, %v1422
    %v1424 = vpop.f32.mrb[0].mxu0
    %v1425 = vpop.f32.mrb[0].mxu0
    %v1426 = vadd.f32 %v1265, %v1425
    %v1427 = vpop.f32.mrb[0].mxu0
    %1428 = vmatprep.mubr.bf16.mxu0 %v673
    %1429 = vmatmul.mubr.bf16.gmra.mrb[0].mxu0 %v672
    %v1430 = vpop.f32.mrb[0].mxu0
    %v1431 = vadd.f32 %v1270, %v1430
    %v1432 = vpop.f32.mrb[0].mxu0
    %v1433 = vpop.f32.mrb[0].mxu0
    %v1434 = vadd.f32 %v1273, %v1433
    %v1435 = vpop.f32.mrb[0].mxu0
    %1436 = vmatprep.mubr.bf16.mxu0 %v680
    %1437 = vmatmul.mubr.bf16.gmra.mrb[0].mxu0 %v679
    %v1438 = vpop.f32.mrb[0].mxu0
    %v1439 = vadd.f32 %v1278, %v1438
    %v1440 = vpop.f32.mrb[0].mxu0
    %v1441 = vpop.f32.mrb[0].mxu0
    %v1442 = vadd.f32 %v1281, %v1441
    %v1443 = vpop.f32.mrb[0].mxu0
    %1444 = vmatprep.mubr.bf16.mxu0 %v687
    %1445 = vmatmul.mubr.bf16.gmra.mrb[0].mxu0 %v686
    %v1446 = vpop.f32.mrb[0].mxu0
    %v1447 = vadd.f32 %v1286, %v1446
    %v1448 = vpop.f32.mrb[0].mxu0
    %v1449 = vpop.f32.mrb[0].mxu0
    %v1450 = vadd.f32 %v1289, %v1449
    %v1451 = vpop.f32.mrb[0].mxu0
    %1452 = vmatprep.mubr.bf16.mxu0 %v694
    %1453 = vmatmul.mubr.bf16.gmra.mrb[0].mxu0 %v693
    %v1454 = vpop.f32.mrb[0].mxu0
    %v1455 = vadd.f32 %v1294, %v1454
    %v1456 = vpop.f32.mrb[0].mxu0
    %v1457 = vpop.f32.mrb[0].mxu0
    %v1458 = vadd.f32 %v1297, %v1457
    %v1459 = vpop.f32.mrb[0].mxu0
    %1460 = vmatprep.mubr.bf16.mxu0 %v701
    %1461 = vmatmul.mubr.bf16.gmra.mrb[0].mxu0 %v700
    %v1462 = vpop.f32.mrb[0].mxu0
    %v1463 = vadd.f32 %v1302, %v1462
    %v1464 = vpop.f32.mrb[0].mxu0
    %v1465 = vpop.f32.mrb[0].mxu0
    %v1466 = vadd.f32 %v1305, %v1465
    %v1467 = vpop.f32.mrb[0].mxu0
    %1468 = vmatprep.mubr.bf16.mxu0 %v708
    %1469 = vmatmul.mubr.bf16.gmra.mrb[0].mxu0 %v707
    %v1470 = vpop.f32.mrb[0].mxu0
    %v1471 = vadd.f32 %v1310, %v1470
    %v1472 = vpop.f32.mrb[0].mxu0
    %v1473 = vpop.f32.mrb[0].mxu0
    %v1474 = vadd.f32 %v1313, %v1473
    %v1475 = vpop.f32.mrb[0].mxu0
    %1476 = vmatprep.mubr.bf16.mxu0 %v715
    %1477 = vmatmul.mubr.bf16.gmra.mrb[0].mxu0 %v714
    %v1478 = vpop.f32.mrb[0].mxu0
    %v1479 = vadd.f32 %v1318, %v1478
    %v1480 = vpop.f32.mrb[0].mxu0
    %v1481 = vpop.f32.mrb[0].mxu0
    %v1482 = vadd.f32 %v1321, %v1481
    %v1483 = vpop.f32.mrb[0].mxu0
    %1484 = vmatprep.mubr.bf16.mxu0 %v722
    %1485 = vmatmul.mubr.bf16.gmra.mrb[0].mxu0 %v721
    %v1486 = vpop.f32.mrb[0].mxu0
    %v1487 = vadd.f32 %v1326, %v1486
    %v1488 = vpop.f32.mrb[0].mxu0
    %v1489 = vpop.f32.mrb[0].mxu0
    %v1490 = vadd.f32 %v1329, %v1489
    %v1491 = vpop.f32.mrb[0].mxu0
    %1492 = vmatprep.mubr.bf16.mxu0 %v729
    %1493 = vmatmul.mubr.bf16.gmra.mrb[0].mxu0 %v728
    %v1494 = vpop.f32.mrb[0].mxu0
    %v1495 = vadd.f32 %v1334, %v1494
    %v1496 = vpop.f32.mrb[0].mxu0
    %v1497 = vpop.f32.mrb[0].mxu0
    %v1498 = vadd.f32 %v1337, %v1497
    %v1499 = vpop.f32.mrb[0].mxu0
    %1500 = vmatprep.mubr.bf16.mxu0 %v736
    %1501 = vmatmul.mubr.bf16.gmra.mrb[0].mxu0 %v735
    %v1502 = vpop.f32.mrb[0].mxu0
    %v1503 = vadd.f32 %v1342, %v1502
    %v1504 = vpop.f32.mrb[0].mxu0
    %v1505 = vpop.f32.mrb[0].mxu0
    %v1506 = vadd.f32 %v1345, %v1505
    %v1507 = vpop.f32.mrb[0].mxu0
    %1508 = vmatprep.mubr.bf16.mxu0 %v743
    %1509 = vmatmul.mubr.bf16.gmra.mrb[0].mxu0 %v742
    %v1510 = vpop.f32.mrb[0].mxu0
    %v1511 = vadd.f32 %v1350, %v1510
    %v1512 = vpop.f32.mrb[0].mxu0
    %v1513 = vpop.f32.mrb[0].mxu0
    %v1514 = vadd.f32 %v1353, %v1513
    %v1515 = vpop.f32.mrb[0].mxu0
    %1516 = vdwg.mxu0
    %1517 = vmatprep.subr.bf16.mxu0 0
    %1518 = vmatpush1.bf16.msra.mxu0 %v1115
    %1519 = vmatprep.subr.bf16.mxu0 0
    %1520 = vmatpush1.bf16.msra.mxu0 %v1116
    %1521 = vmatprep.subr.bf16.mxu0 0
    %1522 = vmatpush1.bf16.msra.mxu0 %v1117
    %1523 = vmatprep.subr.bf16.mxu0 0
    %1524 = vmatpush1.bf16.msra.mxu0 %v1118
    %1525 = vmatprep.subr.bf16.mxu0 0
    %1526 = vmatpush1.bf16.msra.mxu0 %v1119
    %1527 = vmatprep.subr.bf16.mxu0 0
    %1528 = vmatpush1.bf16.msra.mxu0 %v1120
    %1529 = vmatprep.subr.bf16.mxu0 0
    %1530 = vmatpush1.bf16.msra.mxu0 %v1121
    %1531 = vmatprep.subr.bf16.mxu0 0
    %1532 = vmatpush1.bf16.msra.mxu0 %v1122
    %1533 = vmatprep.subr.bf16.mxu0 0
    %1534 = vmatpush1.bf16.msra.mxu0 %v1123
    %1535 = vmatprep.subr.bf16.mxu0 0
    %1536 = vmatpush1.bf16.msra.mxu0 %v1124
    %1537 = vmatprep.subr.bf16.mxu0 0
    %1538 = vmatpush1.bf16.msra.mxu0 %v1125
    %1539 = vmatprep.subr.bf16.mxu0 0
    %1540 = vmatpush1.bf16.msra.mxu0 %v1126
    %1541 = vmatprep.subr.bf16.mxu0 0
    %1542 = vmatpush1.bf16.msra.mxu0 %v1127
    %1543 = vmatprep.subr.bf16.mxu0 0
    %1544 = vmatpush1.bf16.msra.mxu0 %v1128
    %1545 = vmatprep.subr.bf16.mxu0 0
    %1546 = vmatpush1.bf16.msra.mxu0 %v1129
    %1547 = vmatprep.subr.bf16.mxu0 0
    %1548 = vmatpush1.bf16.msra.mxu0 %v1130
    %1549 = vmatprep.mubr.bf16.mxu0 %v640
    %1550 = vmatmul.mubr.bf16.gmra.mrb[0].mxu0 %v639
    %v1551 = vpop.f32.mrb[0].mxu0
    %v1552 = vadd.f32 %v1391, %v1551
    %v1553 = vpop.f32.mrb[0].mxu0
    %v1554 = vpop.f32.mrb[0].mxu0
    %v1555 = vadd.f32 %v1394, %v1554
    %v1556 = vpop.f32.mrb[0].mxu0
    %1557 = vmatprep.mubr.bf16.mxu0 %v647
    %1558 = vmatmul.mubr.bf16.gmra.mrb[0].mxu0 %v646
    %v1559 = vpop.f32.mrb[0].mxu0
    %v1560 = vadd.f32 %v1399, %v1559
    %v1561 = vpop.f32.mrb[0].mxu0
    %v1562 = vpop.f32.mrb[0].mxu0
    %v1563 = vadd.f32 %v1402, %v1562
    %v1564 = vpop.f32.mrb[0].mxu0
    %1565 = vmatprep.mubr.bf16.mxu0 %v654
    %1566 = vmatmul.mubr.bf16.gmra.mrb[0].mxu0 %v653
    %v1567 = vpop.f32.mrb[0].mxu0
    %v1568 = vadd.f32 %v1407, %v1567
    %v1569 = vpop.f32.mrb[0].mxu0
    %v1570 = vpop.f32.mrb[0].mxu0
    %v1571 = vadd.f32 %v1410, %v1570
    %v1572 = vpop.f32.mrb[0].mxu0
    %1573 = vmatprep.mubr.bf16.mxu0 %v661
    %1574 = vmatmul.mubr.bf16.gmra.mrb[0].mxu0 %v660
    %v1575 = vpop.f32.mrb[0].mxu0
    %v1576 = vadd.f32 %v1415, %v1575
    %v1577 = vpop.f32.mrb[0].mxu0
    %v1578 = vpop.f32.mrb[0].mxu0
    %v1579 = vadd.f32 %v1418, %v1578
    %v1580 = vpop.f32.mrb[0].mxu0
    %1581 = vmatprep.mubr.bf16.mxu0 %v668
    %1582 = vmatmul.mubr.bf16.gmra.mrb[0].mxu0 %v667
    %v1583 = vpop.f32.mrb[0].mxu0
    %v1584 = vadd.f32 %v1423, %v1583
    %v1585 = vpop.f32.mrb[0].mxu0
    %v1586 = vpop.f32.mrb[0].mxu0
    %v1587 = vadd.f32 %v1426, %v1586
    %v1588 = vpop.f32.mrb[0].mxu0
    %1589 = vmatprep.mubr.bf16.mxu0 %v675
    %1590 = vmatmul.mubr.bf16.gmra.mrb[0].mxu0 %v674
    %v1591 = vpop.f32.mrb[0].mxu0
    %v1592 = vadd.f32 %v1431, %v1591
    %v1593 = vpop.f32.mrb[0].mxu0
    %v1594 = vpop.f32.mrb[0].mxu0
    %v1595 = vadd.f32 %v1434, %v1594
    %v1596 = vpop.f32.mrb[0].mxu0
    %1597 = vmatprep.mubr.bf16.mxu0 %v682
    %1598 = vmatmul.mubr.bf16.gmra.mrb[0].mxu0 %v681
    %v1599 = vpop.f32.mrb[0].mxu0
    %v1600 = vadd.f32 %v1439, %v1599
    %v1601 = vpop.f32.mrb[0].mxu0
    %v1602 = vpop.f32.mrb[0].mxu0
    %v1603 = vadd.f32 %v1442, %v1602
    %v1604 = vpop.f32.mrb[0].mxu0
    %1605 = vmatprep.mubr.bf16.mxu0 %v689
    %1606 = vmatmul.mubr.bf16.gmra.mrb[0].mxu0 %v688
    %v1607 = vpop.f32.mrb[0].mxu0
    %v1608 = vadd.f32 %v1447, %v1607
    %v1609 = vpop.f32.mrb[0].mxu0
    %v1610 = vpop.f32.mrb[0].mxu0
    %v1611 = vadd.f32 %v1450, %v1610
    %v1612 = vpop.f32.mrb[0].mxu0
    %1613 = vmatprep.mubr.bf16.mxu0 %v696
    %1614 = vmatmul.mubr.bf16.gmra.mrb[0].mxu0 %v695
    %v1615 = vpop.f32.mrb[0].mxu0
    %v1616 = vadd.f32 %v1455, %v1615
    %v1617 = vpop.f32.mrb[0].mxu0
    %v1618 = vpop.f32.mrb[0].mxu0
    %v1619 = vadd.f32 %v1458, %v1618
    %v1620 = vpop.f32.mrb[0].mxu0
    %1621 = vmatprep.mubr.bf16.mxu0 %v703
    %1622 = vmatmul.mubr.bf16.gmra.mrb[0].mxu0 %v702
    %v1623 = vpop.f32.mrb[0].mxu0
    %v1624 = vadd.f32 %v1463, %v1623
    %v1625 = vpop.f32.mrb[0].mxu0
    %v1626 = vpop.f32.mrb[0].mxu0
    %v1627 = vadd.f32 %v1466, %v1626
    %v1628 = vpop.f32.mrb[0].mxu0
    %1629 = vmatprep.mubr.bf16.mxu0 %v710
    %1630 = vmatmul.mubr.bf16.gmra.mrb[0].mxu0 %v709
    %v1631 = vpop.f32.mrb[0].mxu0
    %v1632 = vadd.f32 %v1471, %v1631
    %v1633 = vpop.f32.mrb[0].mxu0
    %v1634 = vpop.f32.mrb[0].mxu0
    %v1635 = vadd.f32 %v1474, %v1634
    %v1636 = vpop.f32.mrb[0].mxu0
    %1637 = vmatprep.mubr.bf16.mxu0 %v717
    %1638 = vmatmul.mubr.bf16.gmra.mrb[0].mxu0 %v716
    %v1639 = vpop.f32.mrb[0].mxu0
    %v1640 = vadd.f32 %v1479, %v1639
    %v1641 = vpop.f32.mrb[0].mxu0
    %v1642 = vpop.f32.mrb[0].mxu0
    %v1643 = vadd.f32 %v1482, %v1642
    %v1644 = vpop.f32.mrb[0].mxu0
    %1645 = vmatprep.mubr.bf16.mxu0 %v724
    %1646 = vmatmul.mubr.bf16.gmra.mrb[0].mxu0 %v723
    %v1647 = vpop.f32.mrb[0].mxu0
    %v1648 = vadd.f32 %v1487, %v1647
    %v1649 = vpop.f32.mrb[0].mxu0
    %v1650 = vpop.f32.mrb[0].mxu0
    %v1651 = vadd.f32 %v1490, %v1650
    %v1652 = vpop.f32.mrb[0].mxu0
    %1653 = vmatprep.mubr.bf16.mxu0 %v731
    %1654 = vmatmul.mubr.bf16.gmra.mrb[0].mxu0 %v730
    %v1655 = vpop.f32.mrb[0].mxu0
    %v1656 = vadd.f32 %v1495, %v1655
    %v1657 = vpop.f32.mrb[0].mxu0
    %v1658 = vpop.f32.mrb[0].mxu0
    %v1659 = vadd.f32 %v1498, %v1658
    %v1660 = vpop.f32.mrb[0].mxu0
    %1661 = vmatprep.mubr.bf16.mxu0 %v738
    %1662 = vmatmul.mubr.bf16.gmra.mrb[0].mxu0 %v737
    %v1663 = vpop.f32.mrb[0].mxu0
    %v1664 = vadd.f32 %v1503, %v1663
    %v1665 = vpop.f32.mrb[0].mxu0
    %v1666 = vpop.f32.mrb[0].mxu0
    %v1667 = vadd.f32 %v1506, %v1666
    %v1668 = vpop.f32.mrb[0].mxu0
    %1669 = vmatprep.mubr.bf16.mxu0 %v745
    %1670 = vmatmul.mubr.bf16.gmra.mrb[0].mxu0 %v744
    %v1671 = vpop.f32.mrb[0].mxu0
    %v1672 = vadd.f32 %v1511, %v1671
    %v1673 = vpop.f32.mrb[0].mxu0
    %v1674 = vpop.f32.mrb[0].mxu0
    %v1675 = vadd.f32 %v1514, %v1674
    %v1676 = vpop.f32.mrb[0].mxu0
    %1677 = vdwg.mxu0
    %1678 = vmatprep.subr.bf16.mxu0 0
    %1679 = vmatpush1.bf16.msra.mxu0 %v1131
    %1680 = vmatprep.subr.bf16.mxu0 0
    %1681 = vmatpush1.bf16.msra.mxu0 %v1132
    %1682 = vmatprep.subr.bf16.mxu0 0
    %1683 = vmatpush1.bf16.msra.mxu0 %v1133
    %1684 = vmatprep.subr.bf16.mxu0 0
    %1685 = vmatpush1.bf16.msra.mxu0 %v1134
    %1686 = vmatprep.subr.bf16.mxu0 0
    %1687 = vmatpush1.bf16.msra.mxu0 %v1135
    %1688 = vmatprep.subr.bf16.mxu0 0
    %1689 = vmatpush1.bf16.msra.mxu0 %v1136
    %1690 = vmatprep.subr.bf16.mxu0 0
    %1691 = vmatpush1.bf16.msra.mxu0 %v1137
    %1692 = vmatprep.subr.bf16.mxu0 0
    %1693 = vmatpush1.bf16.msra.mxu0 %v1138
    %1694 = vmatprep.subr.bf16.mxu0 0
    %1695 = vmatpush1.bf16.msra.mxu0 0
    %1696 = vmatprep.subr.bf16.mxu0 0
    %1697 = vmatpush1.bf16.msra.mxu0 0
    %1698 = vmatprep.subr.bf16.mxu0 0
    %1699 = vmatpush1.bf16.msra.mxu0 0
    %1700 = vmatprep.subr.bf16.mxu0 0
    %1701 = vmatpush1.bf16.msra.mxu0 0
    %1702 = vmatprep.subr.bf16.mxu0 0
    %1703 = vmatpush1.bf16.msra.mxu0 0
    %1704 = vmatprep.subr.bf16.mxu0 0
    %1705 = vmatpush1.bf16.msra.mxu0 0
    %1706 = vmatprep.subr.bf16.mxu0 0
    %1707 = vmatpush1.bf16.msra.mxu0 0
    %1708 = vmatprep.subr.bf16.mxu0 0
    %1709 = vmatpush1.bf16.msra.mxu0 0
    %1710 = vmatprep.mubr.bf16.mxu0 0
    %1711 = vmatmul.mubr.bf16.gmra.mrb[0].mxu0 %v641
    %v1712 = vpop.f32.mrb[0].mxu0
    %v1713 = vadd.f32 %v1552, %v1712
    %v1714 = vpop.f32.mrb[0].mxu0
    %v1715 = vpop.f32.mrb[0].mxu0
    %v1716 = vadd.f32 %v1555, %v1715
    %v1717 = vpop.f32.mrb[0].mxu0
    %1718 = vmatprep.mubr.bf16.mxu0 0
    %1719 = vmatmul.mubr.bf16.gmra.mrb[0].mxu0 %v648
    %v1720 = vpop.f32.mrb[0].mxu0
    %v1721 = vadd.f32 %v1560, %v1720
    %v1722 = vpop.f32.mrb[0].mxu0
    %v1723 = vpop.f32.mrb[0].mxu0
    %v1724 = vadd.f32 %v1563, %v1723
    %v1725 = vpop.f32.mrb[0].mxu0
    %1726 = vmatprep.mubr.bf16.mxu0 0
    %1727 = vmatmul.mubr.bf16.gmra.mrb[0].mxu0 %v655
    %v1728 = vpop.f32.mrb[0].mxu0
    %v1729 = vadd.f32 %v1568, %v1728
    %v1730 = vpop.f32.mrb[0].mxu0
    %v1731 = vpop.f32.mrb[0].mxu0
    %v1732 = vadd.f32 %v1571, %v1731
    %v1733 = vpop.f32.mrb[0].mxu0
    %1734 = vmatprep.mubr.bf16.mxu0 0
    %1735 = vmatmul.mubr.bf16.gmra.mrb[0].mxu0 %v662
    %v1736 = vpop.f32.mrb[0].mxu0
    %v1737 = vadd.f32 %v1576, %v1736
    %v1738 = vpop.f32.mrb[0].mxu0
    %v1739 = vpop.f32.mrb[0].mxu0
    %v1740 = vadd.f32 %v1579, %v1739
    %v1741 = vpop.f32.mrb[0].mxu0
    %1742 = vmatprep.mubr.bf16.mxu0 0
    %1743 = vmatmul.mubr.bf16.gmra.mrb[0].mxu0 %v669
    %v1744 = vpop.f32.mrb[0].mxu0
    %v1745 = vadd.f32 %v1584, %v1744
    %v1746 = vpop.f32.mrb[0].mxu0
    %v1747 = vpop.f32.mrb[0].mxu0
    %v1748 = vadd.f32 %v1587, %v1747
    %v1749 = vpop.f32.mrb[0].mxu0
    %1750 = vmatprep.mubr.bf16.mxu0 0
    %1751 = vmatmul.mubr.bf16.gmra.mrb[0].mxu0 %v676
    %v1752 = vpop.f32.mrb[0].mxu0
    %v1753 = vadd.f32 %v1592, %v1752
    %v1754 = vpop.f32.mrb[0].mxu0
    %v1755 = vpop.f32.mrb[0].mxu0
    %v1756 = vadd.f32 %v1595, %v1755
    %v1757 = vpop.f32.mrb[0].mxu0
    %1758 = vmatprep.mubr.bf16.mxu0 0
    %1759 = vmatmul.mubr.bf16.gmra.mrb[0].mxu0 %v683
    %v1760 = vpop.f32.mrb[0].mxu0
    %v1761 = vadd.f32 %v1600, %v1760
    %v1762 = vpop.f32.mrb[0].mxu0
    %v1763 = vpop.f32.mrb[0].mxu0
    %v1764 = vadd.f32 %v1603, %v1763
    %v1765 = vpop.f32.mrb[0].mxu0
    %1766 = vmatprep.mubr.bf16.mxu0 0
    %1767 = vmatmul.mubr.bf16.gmra.mrb[0].mxu0 %v690
    %v1768 = vpop.f32.mrb[0].mxu0
    %v1769 = vadd.f32 %v1608, %v1768
    %v1770 = vpop.f32.mrb[0].mxu0
    %v1771 = vpop.f32.mrb[0].mxu0
    %v1772 = vadd.f32 %v1611, %v1771
    %v1773 = vpop.f32.mrb[0].mxu0
    %1774 = vmatprep.mubr.bf16.mxu0 0
    %1775 = vmatmul.mubr.bf16.gmra.mrb[0].mxu0 %v697
    %v1776 = vpop.f32.mrb[0].mxu0
    %v1777 = vadd.f32 %v1616, %v1776
    %v1778 = vpop.f32.mrb[0].mxu0
    %v1779 = vpop.f32.mrb[0].mxu0
    %v1780 = vadd.f32 %v1619, %v1779
    %v1781 = vpop.f32.mrb[0].mxu0
    %1782 = vmatprep.mubr.bf16.mxu0 0
    %1783 = vmatmul.mubr.bf16.gmra.mrb[0].mxu0 %v704
    %v1784 = vpop.f32.mrb[0].mxu0
    %v1785 = vadd.f32 %v1624, %v1784
    %v1786 = vpop.f32.mrb[0].mxu0
    %v1787 = vpop.f32.mrb[0].mxu0
    %v1788 = vadd.f32 %v1627, %v1787
    %v1789 = vpop.f32.mrb[0].mxu0
    %1790 = vmatprep.mubr.bf16.mxu0 0
    %1791 = vmatmul.mubr.bf16.gmra.mrb[0].mxu0 %v711
    %v1792 = vpop.f32.mrb[0].mxu0
    %v1793 = vadd.f32 %v1632, %v1792
    %v1794 = vpop.f32.mrb[0].mxu0
    %v1795 = vpop.f32.mrb[0].mxu0
    %v1796 = vadd.f32 %v1635, %v1795
    %v1797 = vpop.f32.mrb[0].mxu0
    %1798 = vmatprep.mubr.bf16.mxu0 0
    %1799 = vmatmul.mubr.bf16.gmra.mrb[0].mxu0 %v718
    %v1800 = vpop.f32.mrb[0].mxu0
    %v1801 = vadd.f32 %v1640, %v1800
    %v1802 = vpop.f32.mrb[0].mxu0
    %v1803 = vpop.f32.mrb[0].mxu0
    %v1804 = vadd.f32 %v1643, %v1803
    %v1805 = vpop.f32.mrb[0].mxu0
    %1806 = vmatprep.mubr.bf16.mxu0 0
    %1807 = vmatmul.mubr.bf16.gmra.mrb[0].mxu0 %v725
    %v1808 = vpop.f32.mrb[0].mxu0
    %v1809 = vadd.f32 %v1648, %v1808
    %v1810 = vpop.f32.mrb[0].mxu0
    %v1811 = vpop.f32.mrb[0].mxu0
    %v1812 = vadd.f32 %v1651, %v1811
    %v1813 = vpop.f32.mrb[0].mxu0
    %1814 = vmatprep.mubr.bf16.mxu0 0
    %1815 = vmatmul.mubr.bf16.gmra.mrb[0].mxu0 %v732
    %v1816 = vpop.f32.mrb[0].mxu0
    %v1817 = vadd.f32 %v1656, %v1816
    %v1818 = vpop.f32.mrb[0].mxu0
    %v1819 = vpop.f32.mrb[0].mxu0
    %v1820 = vadd.f32 %v1659, %v1819
    %v1821 = vpop.f32.mrb[0].mxu0
    %1822 = vmatprep.mubr.bf16.mxu0 0
    %1823 = vmatmul.mubr.bf16.gmra.mrb[0].mxu0 %v739
    %v1824 = vpop.f32.mrb[0].mxu0
    %v1825 = vadd.f32 %v1664, %v1824
    %v1826 = vpop.f32.mrb[0].mxu0
    %v1827 = vpop.f32.mrb[0].mxu0
    %v1828 = vadd.f32 %v1667, %v1827
    %v1829 = vpop.f32.mrb[0].mxu0
    %1830 = vmatprep.mubr.bf16.mxu0 0
    %1831 = vmatmul.mubr.bf16.gmra.mrb[0].mxu0 %v746
    %v1832 = vpop.f32.mrb[0].mxu0
    %v1833 = vadd.f32 %v1672, %v1832
    %v1834 = vpop.f32.mrb[0].mxu0
    %v1835 = vpop.f32.mrb[0].mxu0
    %v1836 = vadd.f32 %v1675, %v1835
    %v1837 = vpop.f32.mrb[0].mxu0
    %1838 = vdwg.mxu0
    %v1839 = vmax.f32 %v1713, 0.0
    %v1840 = vmax.f32 %v1716, 0.0
    %v1841 = vmax.f32 %v1721, 0.0
    %v1842 = vmax.f32 %v1724, 0.0
    %v1843 = vmax.f32 %v1729, 0.0
    %v1844 = vmax.f32 %v1732, 0.0
    %v1845 = vmax.f32 %v1737, 0.0
    %v1846 = vmax.f32 %v1740, 0.0
    %v1847 = vmax.f32 %v1745, 0.0
    %v1848 = vmax.f32 %v1748, 0.0
    %v1849 = vmax.f32 %v1753, 0.0
    %v1850 = vmax.f32 %v1756, 0.0
    %v1851 = vmax.f32 %v1761, 0.0
    %v1852 = vmax.f32 %v1764, 0.0
    %v1853 = vmax.f32 %v1769, 0.0
    %v1854 = vmax.f32 %v1772, 0.0
    %v1855 = vmax.f32 %v1777, 0.0
    %v1856 = vmax.f32 %v1780, 0.0
    %v1857 = vmax.f32 %v1785, 0.0
    %v1858 = vmax.f32 %v1788, 0.0
    %v1859 = vmax.f32 %v1793, 0.0
    %v1860 = vmax.f32 %v1796, 0.0
    %v1861 = vmax.f32 %v1801, 0.0
    %v1862 = vmax.f32 %v1804, 0.0
    %v1863 = vmax.f32 %v1809, 0.0
    %v1864 = vmax.f32 %v1812, 0.0
    %v1865 = vmax.f32 %v1817, 0.0
    %v1866 = vmax.f32 %v1820, 0.0
    %v1867 = vmax.f32 %v1825, 0.0
    %v1868 = vmax.f32 %v1828, 0.0
    %v1869 = vmax.f32 %v1833, 0.0
    %v1870 = vmax.f32 %v1836, 0.0
    %v1871 = vld [vmem:[%s3] sm:$0xff]
    %v1872 = vld [vmem:[%s3 + $0x8] sm:$0xff]
    %v1873 = vld [vmem:[%s3 + $0x10] sm:$0xff]
    %v1874 = vld [vmem:[%s3 + $0x18] sm:$0xff]
    %v1875 = vld [vmem:[%s4] sm:$0x1]
    %v1877 = vlaneseq
    %v1878 = vshrl.u32 %v1877, 7
    %v1879 = vsub.s32 0, %v1878
    %v1880 = vrot.slane %v1875, %v1879
    %vm1882 = vcmask 261120
    %v1884 = vsel %vm1882, %v1839, 0
    %v1887 = vsel %vm1882, %v1840, 0
    %v1890 = vsel %vm1882, %v1841, 0
    %v1893 = vsel %vm1882, %v1842, 0
    %v1896 = vsel %vm1882, %v1843, 0
    %v1899 = vsel %vm1882, %v1844, 0
    %v1902 = vsel %vm1882, %v1845, 0
    %v1905 = vsel %vm1882, %v1846, 0
    %v1908 = vsel %vm1882, %v1847, 0
    %v1911 = vsel %vm1882, %v1848, 0
    %v1914 = vsel %vm1882, %v1849, 0
    %v1917 = vsel %vm1882, %v1850, 0
    %v1920 = vsel %vm1882, %v1851, 0
    %v1923 = vsel %vm1882, %v1852, 0
    %v1926 = vsel %vm1882, %v1853, 0
    %v1929 = vsel %vm1882, %v1854, 0
    %v1932 = vsel %vm1882, %v1855, 0
    %v1935 = vsel %vm1882, %v1856, 0
    %v1938 = vsel %vm1882, %v1857, 0
    %v1941 = vsel %vm1882, %v1858, 0
    %v1944 = vsel %vm1882, %v1859, 0
    %v1947 = vsel %vm1882, %v1860, 0
    %v1950 = vsel %vm1882, %v1861, 0
    %v1953 = vsel %vm1882, %v1862, 0
    %v1956 = vsel %vm1882, %v1863, 0
    %v1959 = vsel %vm1882, %v1864, 0
    %v1962 = vsel %vm1882, %v1865, 0
    %v1965 = vsel %vm1882, %v1866, 0
    %v1968 = vsel %vm1882, %v1867, 0
    %v1971 = vsel %vm1882, %v1868, 0
    %v1974 = vsel %vm1882, %v1869, 0
    %v1977 = vsel %vm1882, %v1870, 0
    %1979 = vmatprep.subr.mxu0 0.0
    %1980 = vmatpush1.msra.mxu0 %v1871
    %1981 = vmatprep.subr.mxu0 0.0
    %1982 = vmatpush1.msra.mxu0 %v1872
    %1983 = vmatprep.subr.mxu0 0.0
    %1984 = vmatpush1.msra.mxu0 %v1873
    %1985 = vmatprep.subr.mxu0 0.0
    %1986 = vmatpush1.msra.mxu0 %v1874
    %1987 = vmatprep.subr.mxu0 0.0
    %1988 = vmatpush1.msra.mxu0 0.0
    %1989 = vmatprep.subr.mxu0 0.0
    %1990 = vmatpush1.msra.mxu0 0.0
    %1991 = vmatprep.subr.mxu0 0.0
    %1992 = vmatpush1.msra.mxu0 0.0
    %1993 = vmatprep.subr.mxu0 0.0
    %1994 = vmatpush1.msra.mxu0 0.0
    %1995 = vmatprep.subr.mxu0 0.0
    %1996 = vmatpush1.msra.mxu0 0.0
    %1997 = vmatprep.subr.mxu0 0.0
    %1998 = vmatpush1.msra.mxu0 0.0
    %1999 = vmatprep.subr.mxu0 0.0
    %2000 = vmatpush1.msra.mxu0 0.0
    %2001 = vmatprep.subr.mxu0 0.0
    %2002 = vmatpush1.msra.mxu0 0.0
    %2003 = vmatprep.subr.mxu0 0.0
    %2004 = vmatpush1.msra.mxu0 0.0
    %2005 = vmatprep.subr.mxu0 0.0
    %2006 = vmatpush1.msra.mxu0 0.0
    %2007 = vmatprep.subr.mxu0 0.0
    %2008 = vmatpush1.msra.mxu0 0.0
    %2009 = vmatprep.subr.mxu0 0.0
    %2010 = vmatpush1.msra.mxu0 0.0
    %2011 = vmatprep.subr.mxu0 0.0
    %2012 = vmatpush1.msra.mxu0 0.0
    %2013 = vmatprep.subr.mxu0 0.0
    %2014 = vmatpush1.msra.mxu0 0.0
    %2015 = vmatprep.subr.mxu0 0.0
    %2016 = vmatpush1.msra.mxu0 0.0
    %2017 = vmatprep.subr.mxu0 0.0
    %2018 = vmatpush1.msra.mxu0 0.0
    %2019 = vmatprep.subr.mxu0 0.0
    %2020 = vmatpush1.msra.mxu0 0.0
    %2021 = vmatprep.subr.mxu0 0.0
    %2022 = vmatpush1.msra.mxu0 0.0
    %2023 = vmatprep.subr.mxu0 0.0
    %2024 = vmatpush1.msra.mxu0 0.0
    %2025 = vmatprep.subr.mxu0 0.0
    %2026 = vmatpush1.msra.mxu0 0.0
    %2027 = vmatprep.subr.mxu0 0.0
    %2028 = vmatpush1.msra.mxu0 0.0
    %2029 = vmatprep.subr.mxu0 0.0
    %2030 = vmatpush1.msra.mxu0 0.0
    %2031 = vmatprep.subr.mxu0 0.0
    %2032 = vmatpush1.msra.mxu0 0.0
    %2033 = vmatprep.subr.mxu0 0.0
    %2034 = vmatpush1.msra.mxu0 0.0
    %2035 = vmatprep.subr.mxu0 0.0
    %2036 = vmatpush1.msra.mxu0 0.0
    %2037 = vmatprep.subr.mxu0 0.0
    %2038 = vmatpush1.msra.mxu0 0.0
    %2039 = vmatprep.subr.mxu0 0.0
    %2040 = vmatpush1.msra.mxu0 0.0
    %2041 = vmatprep.subr.mxu0 0.0
    %2042 = vmatpush1.msra.mxu0 0.0
    %2043 = vmatprep.mubr.f32.mxu0 0.0
    %2044 = vmatmul.mubr.f32.gmra.mrb[0].mxu0 %v1884
    %v2045 = vpop.f32.mrb[0].mxu0
    %v2046 = vadd.f32 %v1880, %v2045
    %v2047 = vpop.f32.mrb[0].mxu0
    %2048 = vmatprep.mubr.f32.mxu0 0.0
    %2049 = vmatmul.mubr.f32.gmra.mrb[0].mxu0 %v1887
    %v2050 = vpop.f32.mrb[0].mxu0
    %v2051 = vadd.f32 %v1880, %v2050
    %v2052 = vpop.f32.mrb[0].mxu0
    %2053 = vmatprep.mubr.f32.mxu0 0.0
    %2054 = vmatmul.mubr.f32.gmra.mrb[0].mxu0 %v1890
    %v2055 = vpop.f32.mrb[0].mxu0
    %v2056 = vadd.f32 %v1880, %v2055
    %v2057 = vpop.f32.mrb[0].mxu0
    %2058 = vmatprep.mubr.f32.mxu0 0.0
    %2059 = vmatmul.mubr.f32.gmra.mrb[0].mxu0 %v1893
    %v2060 = vpop.f32.mrb[0].mxu0
    %v2061 = vadd.f32 %v1880, %v2060
    %v2062 = vpop.f32.mrb[0].mxu0
    %2063 = vmatprep.mubr.f32.mxu0 0.0
    %2064 = vmatmul.mubr.f32.gmra.mrb[0].mxu0 %v1896
    %v2065 = vpop.f32.mrb[0].mxu0
    %v2066 = vadd.f32 %v1880, %v2065
    %v2067 = vpop.f32.mrb[0].mxu0
    %2068 = vmatprep.mubr.f32.mxu0 0.0
    %2069 = vmatmul.mubr.f32.gmra.mrb[0].mxu0 %v1899
    %v2070 = vpop.f32.mrb[0].mxu0
    %v2071 = vadd.f32 %v1880, %v2070
    %v2072 = vpop.f32.mrb[0].mxu0
    %2073 = vmatprep.mubr.f32.mxu0 0.0
    %2074 = vmatmul.mubr.f32.gmra.mrb[0].mxu0 %v1902
    %v2075 = vpop.f32.mrb[0].mxu0
    %v2076 = vadd.f32 %v1880, %v2075
    %v2077 = vpop.f32.mrb[0].mxu0
    %2078 = vmatprep.mubr.f32.mxu0 0.0
    %2079 = vmatmul.mubr.f32.gmra.mrb[0].mxu0 %v1905
    %v2080 = vpop.f32.mrb[0].mxu0
    %v2081 = vadd.f32 %v1880, %v2080
    %v2082 = vpop.f32.mrb[0].mxu0
    %2083 = vmatprep.mubr.f32.mxu0 0.0
    %2084 = vmatmul.mubr.f32.gmra.mrb[0].mxu0 %v1908
    %v2085 = vpop.f32.mrb[0].mxu0
    %v2086 = vadd.f32 %v1880, %v2085
    %v2087 = vpop.f32.mrb[0].mxu0
    %2088 = vmatprep.mubr.f32.mxu0 0.0
    %2089 = vmatmul.mubr.f32.gmra.mrb[0].mxu0 %v1911
    %v2090 = vpop.f32.mrb[0].mxu0
    %v2091 = vadd.f32 %v1880, %v2090
    %v2092 = vpop.f32.mrb[0].mxu0
    %2093 = vmatprep.mubr.f32.mxu0 0.0
    %2094 = vmatmul.mubr.f32.gmra.mrb[0].mxu0 %v1914
    %v2095 = vpop.f32.mrb[0].mxu0
    %v2096 = vadd.f32 %v1880, %v2095
    %v2097 = vpop.f32.mrb[0].mxu0
    %2098 = vmatprep.mubr.f32.mxu0 0.0
    %2099 = vmatmul.mubr.f32.gmra.mrb[0].mxu0 %v1917
    %v2100 = vpop.f32.mrb[0].mxu0
    %v2101 = vadd.f32 %v1880, %v2100
    %v2102 = vpop.f32.mrb[0].mxu0
    %2103 = vmatprep.mubr.f32.mxu0 0.0
    %2104 = vmatmul.mubr.f32.gmra.mrb[0].mxu0 %v1920
    %v2105 = vpop.f32.mrb[0].mxu0
    %v2106 = vadd.f32 %v1880, %v2105
    %v2107 = vpop.f32.mrb[0].mxu0
    %2108 = vmatprep.mubr.f32.mxu0 0.0
    %2109 = vmatmul.mubr.f32.gmra.mrb[0].mxu0 %v1923
    %v2110 = vpop.f32.mrb[0].mxu0
    %v2111 = vadd.f32 %v1880, %v2110
    %v2112 = vpop.f32.mrb[0].mxu0
    %2113 = vmatprep.mubr.f32.mxu0 0.0
    %2114 = vmatmul.mubr.f32.gmra.mrb[0].mxu0 %v1926
    %v2115 = vpop.f32.mrb[0].mxu0
    %v2116 = vadd.f32 %v1880, %v2115
    %v2117 = vpop.f32.mrb[0].mxu0
    %2118 = vmatprep.mubr.f32.mxu0 0.0
    %2119 = vmatmul.mubr.f32.gmra.mrb[0].mxu0 %v1929
    %v2120 = vpop.f32.mrb[0].mxu0
    %v2121 = vadd.f32 %v1880, %v2120
    %v2122 = vpop.f32.mrb[0].mxu0
    %2123 = vmatprep.mubr.f32.mxu0 0.0
    %2124 = vmatmul.mubr.f32.gmra.mrb[0].mxu0 %v1932
    %v2125 = vpop.f32.mrb[0].mxu0
    %v2126 = vadd.f32 %v1880, %v2125
    %v2127 = vpop.f32.mrb[0].mxu0
    %2128 = vmatprep.mubr.f32.mxu0 0.0
    %2129 = vmatmul.mubr.f32.gmra.mrb[0].mxu0 %v1935
    %v2130 = vpop.f32.mrb[0].mxu0
    %v2131 = vadd.f32 %v1880, %v2130
    %v2132 = vpop.f32.mrb[0].mxu0
    %2133 = vmatprep.mubr.f32.mxu0 0.0
    %2134 = vmatmul.mubr.f32.gmra.mrb[0].mxu0 %v1938
    %v2135 = vpop.f32.mrb[0].mxu0
    %v2136 = vadd.f32 %v1880, %v2135
    %v2137 = vpop.f32.mrb[0].mxu0
    %2138 = vmatprep.mubr.f32.mxu0 0.0
    %2139 = vmatmul.mubr.f32.gmra.mrb[0].mxu0 %v1941
    %v2140 = vpop.f32.mrb[0].mxu0
    %v2141 = vadd.f32 %v1880, %v2140
    %v2142 = vpop.f32.mrb[0].mxu0
    %2143 = vmatprep.mubr.f32.mxu0 0.0
    %2144 = vmatmul.mubr.f32.gmra.mrb[0].mxu0 %v1944
    %v2145 = vpop.f32.mrb[0].mxu0
    %v2146 = vadd.f32 %v1880, %v2145
    %v2147 = vpop.f32.mrb[0].mxu0
    %2148 = vmatprep.mubr.f32.mxu0 0.0
    %2149 = vmatmul.mubr.f32.gmra.mrb[0].mxu0 %v1947
    %v2150 = vpop.f32.mrb[0].mxu0
    %v2151 = vadd.f32 %v1880, %v2150
    %v2152 = vpop.f32.mrb[0].mxu0
    %2153 = vmatprep.mubr.f32.mxu0 0.0
    %2154 = vmatmul.mubr.f32.gmra.mrb[0].mxu0 %v1950
    %v2155 = vpop.f32.mrb[0].mxu0
    %v2156 = vadd.f32 %v1880, %v2155
    %v2157 = vpop.f32.mrb[0].mxu0
    %2158 = vmatprep.mubr.f32.mxu0 0.0
    %2159 = vmatmul.mubr.f32.gmra.mrb[0].mxu0 %v1953
    %v2160 = vpop.f32.mrb[0].mxu0
    %v2161 = vadd.f32 %v1880, %v2160
    %v2162 = vpop.f32.mrb[0].mxu0
    %2163 = vmatprep.mubr.f32.mxu0 0.0
    %2164 = vmatmul.mubr.f32.gmra.mrb[0].mxu0 %v1956
    %v2165 = vpop.f32.mrb[0].mxu0
    %v2166 = vadd.f32 %v1880, %v2165
    %v2167 = vpop.f32.mrb[0].mxu0
    %2168 = vmatprep.mubr.f32.mxu0 0.0
    %2169 = vmatmul.mubr.f32.gmra.mrb[0].mxu0 %v1959
    %v2170 = vpop.f32.mrb[0].mxu0
    %v2171 = vadd.f32 %v1880, %v2170
    %v2172 = vpop.f32.mrb[0].mxu0
    %2173 = vmatprep.mubr.f32.mxu0 0.0
    %2174 = vmatmul.mubr.f32.gmra.mrb[0].mxu0 %v1962
    %v2175 = vpop.f32.mrb[0].mxu0
    %v2176 = vadd.f32 %v1880, %v2175
    %v2177 = vpop.f32.mrb[0].mxu0
    %2178 = vmatprep.mubr.f32.mxu0 0.0
    %2179 = vmatmul.mubr.f32.gmra.mrb[0].mxu0 %v1965
    %v2180 = vpop.f32.mrb[0].mxu0
    %v2181 = vadd.f32 %v1880, %v2180
    %v2182 = vpop.f32.mrb[0].mxu0
    %2183 = vmatprep.mubr.f32.mxu0 0.0
    %2184 = vmatmul.mubr.f32.gmra.mrb[0].mxu0 %v1968
    %v2185 = vpop.f32.mrb[0].mxu0
    %v2186 = vadd.f32 %v1880, %v2185
    %v2187 = vpop.f32.mrb[0].mxu0
    %2188 = vmatprep.mubr.f32.mxu0 0.0
    %2189 = vmatmul.mubr.f32.gmra.mrb[0].mxu0 %v1971
    %v2190 = vpop.f32.mrb[0].mxu0
    %v2191 = vadd.f32 %v1880, %v2190
    %v2192 = vpop.f32.mrb[0].mxu0
    %2193 = vmatprep.mubr.f32.mxu0 0.0
    %2194 = vmatmul.mubr.f32.gmra.mrb[0].mxu0 %v1974
    %v2195 = vpop.f32.mrb[0].mxu0
    %v2196 = vadd.f32 %v1880, %v2195
    %v2197 = vpop.f32.mrb[0].mxu0
    %2198 = vmatprep.mubr.f32.mxu0 0.0
    %2199 = vmatmul.mubr.f32.gmra.mrb[0].mxu0 %v1977
    %v2200 = vpop.f32.mrb[0].mxu0
    %v2201 = vadd.f32 %v1880, %v2200
    %v2202 = vpop.f32.mrb[0].mxu0
    %2203 = vdwg.mxu0
    %2204 = vst [vmem:[#allocation5] sm:$0xff] %v2046
    %2205 = vst [vmem:[#allocation5 + $0x8] sm:$0xff] %v2051
    %2206 = vst [vmem:[#allocation5 + $0x10] sm:$0xff] %v2056
    %2207 = vst [vmem:[#allocation5 + $0x18] sm:$0xff] %v2061
    %2208 = vst [vmem:[#allocation5 + $0x20] sm:$0xff] %v2066
    %2209 = vst [vmem:[#allocation5 + $0x28] sm:$0xff] %v2071
    %2210 = vst [vmem:[#allocation5 + $0x30] sm:$0xff] %v2076
    %2211 = vst [vmem:[#allocation5 + $0x38] sm:$0xff] %v2081
    %2212 = vst [vmem:[#allocation5 + $0x40] sm:$0xff] %v2086
    %2213 = vst [vmem:[#allocation5 + $0x48] sm:$0xff] %v2091
    %2214 = vst [vmem:[#allocation5 + $0x50] sm:$0xff] %v2096
    %2215 = vst [vmem:[#allocation5 + $0x58] sm:$0xff] %v2101
    %2216 = vst [vmem:[#allocation5 + $0x60] sm:$0xff] %v2106
    %2217 = vst [vmem:[#allocation5 + $0x68] sm:$0xff] %v2111
    %2218 = vst [vmem:[#allocation5 + $0x70] sm:$0xff] %v2116
    %2219 = vst [vmem:[#allocation5 + $0x78] sm:$0xff] %v2121
    %2220 = vst [vmem:[#allocation5 + $0x80] sm:$0xff] %v2126
    %2221 = vst [vmem:[#allocation5 + $0x88] sm:$0xff] %v2131
    %2222 = vst [vmem:[#allocation5 + $0x90] sm:$0xff] %v2136
    %2223 = vst [vmem:[#allocation5 + $0x98] sm:$0xff] %v2141
    %2224 = vst [vmem:[#allocation5 + $0xa0] sm:$0xff] %v2146
    %2225 = vst [vmem:[#allocation5 + $0xa8] sm:$0xff] %v2151
    %2226 = vst [vmem:[#allocation5 + $0xb0] sm:$0xff] %v2156
    %2227 = vst [vmem:[#allocation5 + $0xb8] sm:$0xff] %v2161
    %2228 = vst [vmem:[#allocation5 + $0xc0] sm:$0xff] %v2166
    %2229 = vst [vmem:[#allocation5 + $0xc8] sm:$0xff] %v2171
    %2230 = vst [vmem:[#allocation5 + $0xd0] sm:$0xff] %v2176
    %2231 = vst [vmem:[#allocation5 + $0xd8] sm:$0xff] %v2181
    %2232 = vst [vmem:[#allocation5 + $0xe0] sm:$0xff] %v2186
    %2233 = vst [vmem:[#allocation5 + $0xe8] sm:$0xff] %v2191
    %2234 = vst [vmem:[#allocation5 + $0xf0] sm:$0xff] %v2196
    %2235 = vst [vmem:[#allocation5 + $0xf8] sm:$0xff] %v2201
    // Predicated region
    $region26: #{tpu_custom_call.1} parent=1 // pred_check
      _
    $region27: #{tpu_custom_call.1} parent=1 // pred_check_branch
      %2237 = sbr.rel (0) target = $region29
    $region28: #{tpu_custom_call.1} parent=1 // pred_region
      %s2239 = ssub.s32 4096, 4096
      %2240 = vsyncadd [#allocation4], %s2239
      %s2241 = sshll.u32 [#allocation5], 4
      %s2242 = int_to_ptr.vmem [resolvable:$true] %s2241
      %2247 = dma.vmem_to_hbm [thread:$0]  %s2242, 4096, %s5, [#allocation4], 128, 128, 8
    $region29: #{tpu_custom_call.1} parent=1 // pred_fallthru
      _
    // Predicated region
    $region30: #{tpu_custom_call.1} parent=1 // pred_check
      _
    $region31: #{tpu_custom_call.1} parent=1 // pred_check_branch
      %2249 = sbr.rel (0) target = $region33
    $region32: #{tpu_custom_call.1} parent=1 // pred_region
      %2250 = dma.done [#allocation4], 4096
    $region33: #{tpu_custom_call.1} parent=1 // pred_fallthru
      _
    %2251 = vsyncpa [#allocation3], 1
    %2252 = vsyncpa [#allocation4], 1

</llo_original>
